<compile_context>
chip_gen: v7x
topology: tpu7x:2x2x1
jax: 0.10.0
libtpu: 0.0.40
codegen_flags: <defaults>
</compile_context>

<pallas_src>
import functools
import math

import jax
import jax.numpy as jnp
from jax import lax
from jax.experimental import pallas as pl
from jax.experimental.pallas import tpu as pltpu


def _first_order_scan(drive, coef, t_block):
    """Inclusive weighted prefix scan over the leading (time) axis:
    out[t] = sum_{k<=t} coef**(t-k) * drive[k], via ceil(log2(t_block)) shift/add passes.
    Shifts are along the untiled leading dim (cheap concatenates, no lane movement)."""
    acc = drive
    b = drive.shape[1]
    s = 1
    while s < t_block:
        shifted = jnp.concatenate(
            [jnp.zeros((s, b, 1), jnp.float32), acc[: t_block - s]], axis=0)
        acc = acc + (coef ** s) * shifted
        s *= 2
    return acc


def _output_neuron_kernel(
    x_ref,        # VMEM f32[Tb, Bb, N]    inputs (log unnormalized rates)
    rand_ref,     # VMEM f32[3, Tb, Bb, 1] [0]=N(0,sigma) noise, [1]=U loc, [2]=-log(U) spike
    wtri_ref,     # VMEM f32[N, N]         upper-triangular ones (resident cumsum weight)
    spk_ref,      # VMEM f32[Tb, Bb, N]    out: one-hot output spikes
    inh_ref,      # VMEM f32[Tb, Bb, 1]    out: inhibition trace (post-update, == ref inhibition[1:])
    noise_ref,    # VMEM f32[Tb, Bb, 1]    out: filtered noise trace
    thr_scr,      # VMEM f32[Tb, Bb, 1]    scratch: precomputed spike threshold
    spike_scr,    # VMEM f32[Tb, Bb, 1]    scratch: spike_occurred
    inh_carry,    # VMEM f32[1, Bb, 1]     scratch: inhibition state across chunks
    noise_carry,  # VMEM f32[1, Bb, 1]     scratch: noise state across chunks
    *,
    t_block,
    log_dt,
    noise_alpha,
    inhibition_rest,
    inhibition_increase,
    inhibition_factor,
):
    # state=None path: zero initial inhibition / noise at the first time chunk
    # (re-initialized per batch block; time is the inner, sequential grid axis).
    @pl.when(pl.program_id(1) == 0)
    def _():
        inh_carry[...] = jnp.zeros_like(inh_carry)
        noise_carry[...] = jnp.zeros_like(noise_carry)

    x = x_ref[...]                                  # (Tb, Bb, N)
    tb, b, n = x.shape
    noise_r = rand_ref[0]                           # (Tb, Bb, 1)
    u_loc = rand_ref[1]                             # (Tb, Bb, 1)
    neg_log_u = rand_ref[2]                         # (Tb, Bb, 1), -log(U) precomputed

    inh0 = inh_carry[...]                           # (1, Bb, 1) chunk-start inhibition
    nz_prev = noise_carry[...]                      # (1, Bb, 1) chunk-start filtered noise

    # (t+1) along the leading axis, for the carry-decay terms alpha^(t+1), factor^(t+1)
    tpow = lax.broadcasted_iota(jnp.int32, (tb, 1, 1), 0).astype(jnp.float32) + 1.0

    # ---- noise IIR (n[t] = r[t] + alpha*n[t-1]) fully vectorized over the chunk ----
    nz = (_first_order_scan(noise_r, noise_alpha, t_block)
          + jnp.exp(tpow * math.log(noise_alpha)) * nz_prev)
    noise_ref[...] = nz
    noise_carry[...] = nz[t_block - 1:t_block]

    # ---- multinomial spike location, softmax-divide free ----
    m = jnp.max(x, axis=-1, keepdims=True)          # (Tb, Bb, 1)
    e = jnp.exp(x - m)                              # (Tb, Bb, N)
    # inclusive cumsum along the lane axis via a resident triangular MXU weight
    csum = jnp.dot(e.reshape(tb * b, n), wtri_ref[...],
                   preferred_element_type=jnp.float32).reshape(tb, b, n)
    total = csum[:, :, n - 1:n]                     # == sum(e); reused for lse and sampling
    lse = m + jnp.log(total)                        # logsumexp(inputs, -1)
    lane = lax.broadcasted_iota(jnp.int32, (tb, b, n), 2).astype(jnp.float32)
    # first index with cumsum >= u * total; scaling by csum's own last column guarantees
    # exactly one selection even under fp rounding (matches argmax-of-first-True in the ref)
    sel = jnp.min(jnp.where(csum >= u_loc * total, lane, float(n)),
                  axis=-1, keepdims=True)
    spk_ref[...] = (lane == sel).astype(jnp.float32)    # one-hot; gated after the loop

    # ---- fully precomputed spike threshold: logsumexp(inputs+noise,-1) + log(dt) - log(U) ----
    thr_scr[...] = lse + log_dt + neg_log_u + nz

    # ---- the only genuinely sequential part: inhibition gate (1 load + 1 store / step) ----
    def step(t, inh_prev):
        spike = (inh_prev < thr_scr[pl.ds(t, 1), :, :]).astype(jnp.float32)
        spike_scr[pl.ds(t, 1), :, :] = spike
        return (inhibition_rest
                + (inh_prev - inhibition_rest) * inhibition_factor
                + spike * inhibition_increase)

    inh_last = lax.fori_loop(0, t_block, step, inh0, unroll=min(8, t_block))
    inh_carry[...] = inh_last

    spike_occ = spike_scr[...]                      # (Tb, Bb, 1)

    # ---- inhibition trace reconstructed vectorized (post-update values, as in the ref) ----
    inh_ref[...] = (inhibition_rest
                    + jnp.exp(tpow * math.log(inhibition_factor)) * (inh0 - inhibition_rest)
                    + inhibition_increase
                    * _first_order_scan(spike_occ, inhibition_factor, t_block))

    # ---- out_spikes = one_hot(spike_location) * spike_occurred (lane-dense store) ----
    spk_ref[...] = spk_ref[...] * spike_occ


def _pick_blocks(T, B, N, t_block, b_block):
    """VMEM-aware time-chunk selection + batch split (v7x has 2 TensorCores)."""
    if b_block is None:
        b_block = B // 2 if (B >= 16 and B % 16 == 0) else B
    assert B % b_block == 0, "b_block must divide the batch size"
    try:
        info = pltpu.get_tpu_info()
        vmem_cap = int(getattr(info, "vmem_capacity_bytes", 0)) or 64 * 1024 * 1024
    except Exception:
        vmem_cap = 64 * 1024 * 1024   # conservative (v7x-sized) fallback
    if t_block is None:
        budget = int(0.45 * vmem_cap)
        t_block = 1
        for cand in (512, 384, 256, 192, 128, 96, 64, 48, 32, 24, 16, 8, 4, 2, 1):
            if cand > T:
                continue
            blk = 4 * cand * b_block * N
            # 2x double-buffered input + 2x double-buffered spikes + ~4 live f32
            # (Tb,Bb,N) temporaries + resident NxN weight + small per-(t,b) arrays.
            est = 8 * blk + 4 * N * N + 32 * cand * b_block + (1 << 20)
            if est <= budget:
                t_block = cand
                break
    t_block = max(1, min(int(t_block), T))
    return t_block, b_block, vmem_cap


def efficient_stochastic_output_neuron_forward(
    inputs,
    *,
    inhibition_increase,
    inhibition_rest,
    inhibition_tau,
    noise_rest,          # NOTE: dead in the reference forward (only shapes noise_base)
    noise_tau,
    noise_sigma,
    dt=0.001,
    rng_key,
    t_block=None,
    b_block=None,
):
    """Pallas equivalent of EfficientStochasticOutputNeuronCell.forward (state=None).

    inputs: f32[T, B, N]  (time, batch, output neurons)
    returns: (out_spikes [T, B, N], (inhibition [T, B], noise [T, B]))
    """
    assert inputs.ndim == 3, "expected inputs of shape (time, batch, neurons)"
    T, B, N = inputs.shape
    x = inputs.astype(jnp.float32)

    noise_alpha = float(math.exp(-dt / noise_tau))
    inhibition_factor = float(math.exp(-dt / inhibition_tau))
    t_block, b_block, vmem_cap = _pick_blocks(T, B, N, t_block, b_block)

    # Random streams generated once here and streamed in as a single packed input.
    k1, k2, k3 = jax.random.split(rng_key, 3)
    noise_rand = jax.random.normal(k1, (T, B, 1), jnp.float32) * float(noise_sigma)
    u_loc = jax.random.uniform(k2, (T, B, 1), jnp.float32)
    # -log(U) precomputed (U may be 0 -> +inf threshold -> forced spike, same as torch).
    neg_log_u = -jnp.log(jax.random.uniform(k3, (T, B, 1), jnp.float32))
    rand_all = jnp.stack([noise_rand, u_loc, neg_log_u], axis=0)      # (3, T, B, 1)

    # Pad T up to a multiple of t_block; padded tail results are discarded.
    num_chunks = int(pl.cdiv(T, t_block))
    T_pad = num_chunks * t_block
    if T_pad != T:
        pad = T_pad - T
        x = jnp.pad(x, ((0, pad), (0, 0), (0, 0)))
        rand_all = jnp.pad(rand_all, ((0, 0), (0, pad), (0, 0), (0, 0)))
    n_b = B // b_block

    # Resident constant: upper-triangular ones for the lane-axis cumulative sum
    # (constant index_map -> DMA'd once, reused by every grid step).
    w_tri = jnp.triu(jnp.ones((N, N), jnp.float32))

    kernel = functools.partial(
        _output_neuron_kernel,
        t_block=t_block,
        log_dt=float(math.log(dt)),
        noise_alpha=noise_alpha,
        inhibition_rest=float(inhibition_rest),
        inhibition_increase=float(inhibition_increase),
        inhibition_factor=inhibition_factor,
    )

    big_spec = pl.BlockSpec((t_block, b_block, N), lambda bi, ti: (ti, bi, 0))
    small_spec = pl.BlockSpec((t_block, b_block, 1), lambda bi, ti: (ti, bi, 0))
    rand_spec = pl.BlockSpec((3, t_block, b_block, 1), lambda bi, ti: (0, ti, bi, 0))
    wtri_spec = pl.BlockSpec((N, N), lambda bi, ti: (0, 0))

    vmem_limit = int(max(32 * 1024 * 1024, min(int(0.9 * vmem_cap), 128 * 1024 * 1024)))

    spikes, inhibition, noise = pl.pallas_call(
        kernel,
        out_shape=(
            jax.ShapeDtypeStruct((T_pad, B, N), jnp.float32),
            jax.ShapeDtypeStruct((T_pad, B, 1), jnp.float32),
            jax.ShapeDtypeStruct((T_pad, B, 1), jnp.float32),
        ),
        grid=(n_b, num_chunks),
        in_specs=[big_spec, rand_spec, wtri_spec],
        out_specs=(big_spec, small_spec, small_spec),
        scratch_shapes=[
            pltpu.VMEM((t_block, b_block, 1), jnp.float32),   # threshold
            pltpu.VMEM((t_block, b_block, 1), jnp.float32),   # spike occurred
            pltpu.VMEM((1, b_block, 1), jnp.float32),         # inhibition carry
            pltpu.VMEM((1, b_block, 1), jnp.float32),         # noise carry
        ],
        compiler_params=pltpu.CompilerParams(
            # batch blocks are independent ("parallel", sharded across TCs on v7x);
            # the time axis carries the recurrence through scratch ("arbitrary").
            dimension_semantics=("parallel", "arbitrary"),
            vmem_limit_bytes=vmem_limit,
        ),
    )(x, rand_all, w_tri)

    dtype = inputs.dtype
    spikes = spikes[:T].astype(dtype)
    inhibition = inhibition[:T, :, 0].astype(dtype)
    noise = noise[:T, :, 0].astype(dtype)
    # states as in the PyTorch module (state=None, no oscillation): (inhibition, noise[...,0]);
    # inhibition is tracked per batch element (generalizes the reference's scalar carry).
    return spikes, (inhibition, noise)


if __name__ == "__main__":
    key = jax.random.PRNGKey(0)
    k_in, k_rng = jax.random.split(key)

    # (time, batch, output neurons). T=20 is not a multiple of t_block=8 -> exercises
    # padding; B=16 with b_block=8 exercises the parallel batch axis; 3 time chunks
    # exercise the cross-chunk state carries.
    T, B, N = 20, 16, 128
    inputs = jax.random.normal(k_in, (T, B, N), dtype=jnp.float32)

    params = dict(
        inhibition_increase=5.0, inhibition_rest=0.0, inhibition_tau=0.005,
        noise_rest=0.0, noise_tau=0.05, noise_sigma=0.5, dt=0.001,
    )

    out_spikes, (inhibition, noise) = efficient_stochastic_output_neuron_forward(
        inputs, rng_key=k_rng, t_block=8, b_block=8, **params)
    out_spikes = jax.block_until_ready(out_spikes)
    inhibition = jax.block_until_ready(inhibition)
    noise = jax.block_until_ready(noise)

    # ---- shape / value sanity ----
    assert out_spikes.shape == (T, B, N), out_spikes.shape
    assert inhibition.shape == (T, B), inhibition.shape
    assert noise.shape == (T, B), noise.shape
    vals = jnp.unique(out_spikes)
    assert bool(jnp.all((vals == 0.0) | (vals == 1.0)))
    row_sums = out_spikes.sum(-1)                      # WTA: at most one spike per (t, b)
    assert bool(jnp.all((row_sums == 0.0) | (row_sums == 1.0)))
    assert bool(jnp.all(jnp.isfinite(inhibition)))
    assert bool(jnp.all(jnp.isfinite(noise)))

    # ---- numerical cross-checks against the module's recurrences ----
    k1, _, _ = jax.random.split(k_rng, 3)
    noise_rand = jax.random.normal(k1, (T, B, 1), jnp.float32) * params["noise_sigma"]
    alpha = math.exp(-params["dt"] / params["noise_tau"])
    _, noise_chk = lax.scan(lambda c, r: ((r + alpha * c),) * 2,
                            jnp.zeros((B, 1), jnp.float32), noise_rand)
    assert bool(jnp.allclose(noise, noise_chk[..., 0], atol=1e-4)), "noise IIR mismatch"

    factor = math.exp(-params["dt"] / params["inhibition_tau"])
    rest, inc = params["inhibition_rest"], params["inhibition_increase"]
    spike_occ = out_spikes.sum(-1)                     # == spike_occurred per (t, b)
    _, inh_chk = lax.scan(
        lambda c, s: ((rest + (c - rest) * factor + s * inc),) * 2,
        jnp.zeros((B,), jnp.float32), spike_occ)
    assert bool(jnp.allclose(inhibition, inh_chk, atol=1e-3)), "inhibition recurrence mismatch"

    print("KERNEL_OK")
</pallas_src>

<mosaic_0001>
module attributes {stable_mosaic.version = 11 : i64} {
  func.func @_output_neuron_kernel(%arg0: i32, %arg1: i32, %arg2: memref<8x8x128xf32, #tpu.memory_space<vmem>>, %arg3: memref<3x8x8x1xf32, #tpu.memory_space<vmem>>, %arg4: memref<128x128xf32, #tpu.memory_space<vmem>>, %arg5: memref<8x8x128xf32, #tpu.memory_space<vmem>>, %arg6: memref<8x8x1xf32, #tpu.memory_space<vmem>>, %arg7: memref<8x8x1xf32, #tpu.memory_space<vmem>>, %arg8: memref<8x8x1xf32, #tpu.memory_space<vmem>>, %arg9: memref<8x8x1xf32, #tpu.memory_space<vmem>>, %arg10: memref<1x8x1xf32, #tpu.memory_space<vmem>>, %arg11: memref<1x8x1xf32, #tpu.memory_space<vmem>>) attributes {dimension_semantics = [#tpu.dimension_semantics<parallel>, #tpu.dimension_semantics<arbitrary>], iteration_bounds = array<i64: 2, 3>, scalar_prefetch = 0 : i64, scratch_operands = 4 : i64, tpu.core_type = #tpu.core_type<tc>, window_params = [{transform_indices = @transform_0, window_bounds = array<i64: 8, 8, 128>}, {transform_indices = @transform_1, window_bounds = array<i64: 3, 8, 8, 1>}, {pipeline_mode = #tpu.pipeline_mode<synchronous>, transform_indices = @transform_2, window_bounds = array<i64: 128, 128>}, {transform_indices = @transform_3, window_bounds = array<i64: 8, 8, 128>}, {transform_indices = @transform_4, window_bounds = array<i64: 8, 8, 1>}, {transform_indices = @transform_5, window_bounds = array<i64: 8, 8, 1>}]} {
    %c0_i32 = arith.constant 0 : i32
    %0 = arith.cmpi eq, %arg1, %c0_i32 : i32
    %1 = arith.extui %0 : i1 to i32
    %c0_i32_0 = arith.constant 0 : i32
    %2 = arith.cmpi ne, %1, %c0_i32_0 : i32
    scf.if %2 {
      %cst_135 = arith.constant 0.000000e+00 : f32
      %241 = vector.broadcast %cst_135 : f32 to vector<1x8x1xf32>
      %c0_136 = arith.constant 0 : index
      %c0_137 = arith.constant 0 : index
      %c0_138 = arith.constant 0 : index
      %242 = vector.load %arg10[%c0_136, %c0_137, %c0_138] : memref<1x8x1xf32, #tpu.memory_space<vmem>>, vector<1x8x1xf32>
      tpu.vector_store %arg10[%c0_136, %c0_137, %c0_138], %241 {strides = array<i32>} : memref<1x8x1xf32, #tpu.memory_space<vmem>>, vector<1x8x1xf32>,
      %cst_139 = arith.constant 0.000000e+00 : f32
      %243 = vector.broadcast %cst_139 : f32 to vector<1x8x1xf32>
      %c0_140 = arith.constant 0 : index
      %c0_141 = arith.constant 0 : index
      %c0_142 = arith.constant 0 : index
      %244 = vector.load %arg11[%c0_140, %c0_141, %c0_142] : memref<1x8x1xf32, #tpu.memory_space<vmem>>, vector<1x8x1xf32>
      tpu.vector_store %arg11[%c0_140, %c0_141, %c0_142], %243 {strides = array<i32>} : memref<1x8x1xf32, #tpu.memory_space<vmem>>, vector<1x8x1xf32>,
    } else {
    }
    %c0 = arith.constant 0 : index
    %c0_1 = arith.constant 0 : index
    %c0_2 = arith.constant 0 : index
    %3 = vector.load %arg2[%c0, %c0_1, %c0_2] : memref<8x8x128xf32, #tpu.memory_space<vmem>>, vector<8x8x128xf32>
    %c0_3 = arith.constant 0 : index
    %c0_4 = arith.constant 0 : index
    %c0_5 = arith.constant 0 : index
    %c0_6 = arith.constant 0 : index
    %4 = vector.load %arg3[%c0_3, %c0_4, %c0_5, %c0_6] : memref<3x8x8x1xf32, #tpu.memory_space<vmem>>, vector<1x8x8x1xf32>
    %5 = vector.shape_cast %4 : vector<1x8x8x1xf32> to vector<8x8x1xf32>
    %c1 = arith.constant 1 : index
    %c0_7 = arith.constant 0 : index
    %c0_8 = arith.constant 0 : index
    %c0_9 = arith.constant 0 : index
    %6 = vector.load %arg3[%c1, %c0_7, %c0_8, %c0_9] : memref<3x8x8x1xf32, #tpu.memory_space<vmem>>, vector<1x8x8x1xf32>
    %7 = vector.shape_cast %6 : vector<1x8x8x1xf32> to vector<8x8x1xf32>
    %c2 = arith.constant 2 : index
    %c0_10 = arith.constant 0 : index
    %c0_11 = arith.constant 0 : index
    %c0_12 = arith.constant 0 : index
    %8 = vector.load %arg3[%c2, %c0_10, %c0_11, %c0_12] : memref<3x8x8x1xf32, #tpu.memory_space<vmem>>, vector<1x8x8x1xf32>
    %9 = vector.shape_cast %8 : vector<1x8x8x1xf32> to vector<8x8x1xf32>
    %c0_13 = arith.constant 0 : index
    %c0_14 = arith.constant 0 : index
    %c0_15 = arith.constant 0 : index
    %10 = vector.load %arg10[%c0_13, %c0_14, %c0_15] : memref<1x8x1xf32, #tpu.memory_space<vmem>>, vector<1x8x1xf32>
    %c0_16 = arith.constant 0 : index
    %c0_17 = arith.constant 0 : index
    %c0_18 = arith.constant 0 : index
    %11 = vector.load %arg11[%c0_16, %c0_17, %c0_18] : memref<1x8x1xf32, #tpu.memory_space<vmem>>, vector<1x8x1xf32>
    %12 = tpu.iota {dimensions = array<i32: 0>} : vector<8x1x1xi32>
    %13 = arith.sitofp %12 : vector<8x1x1xi32> to vector<8x1x1xf32>
    %cst = arith.constant 1.000000e+00 : f32
    %14 = vector.broadcast %cst : f32 to vector<8x1x1xf32>
    %15 = arith.addf %13, %14 : vector<8x1x1xf32>
    %cst_19 = arith.constant 0.000000e+00 : f32
    %16 = vector.broadcast %cst_19 : f32 to vector<1x8x1xf32>
    %17 = vector.extract_strided_slice %5 {offsets = [0, 0, 0], sizes = [7, 8, 1], strides = [1, 1, 1]} : vector<8x8x1xf32> to vector<7x8x1xf32>
    %18 = tpu.concatenate %16, %17 in 0 : vector<1x8x1xf32>, vector<7x8x1xf32> -> vector<8x8x1xf32>
    %cst_20 = arith.constant 0.980198681 : f32
    %19 = vector.broadcast %cst_20 : f32 to vector<8x8x1xf32>
    %20 = arith.mulf %19, %18 : vector<8x8x1xf32>
    %21 = arith.addf %5, %20 : vector<8x8x1xf32>
    %cst_21 = arith.constant 0.000000e+00 : f32
    %22 = vector.broadcast %cst_21 : f32 to vector<2x8x1xf32>
    %23 = vector.extract_strided_slice %21 {offsets = [0, 0, 0], sizes = [6, 8, 1], strides = [1, 1, 1]} : vector<8x8x1xf32> to vector<6x8x1xf32>
    %24 = tpu.concatenate %22, %23 in 0 : vector<2x8x1xf32>, vector<6x8x1xf32> -> vector<8x8x1xf32>
    %cst_22 = arith.constant 0.960789442 : f32
    %25 = vector.broadcast %cst_22 : f32 to vector<8x8x1xf32>
    %26 = arith.mulf %25, %24 : vector<8x8x1xf32>
    %27 = arith.addf %21, %26 : vector<8x8x1xf32>
    %cst_23 = arith.constant 0.000000e+00 : f32
    %28 = vector.broadcast %cst_23 : f32 to vector<4x8x1xf32>
    %29 = vector.extract_strided_slice %27 {offsets = [0, 0, 0], sizes = [4, 8, 1], strides = [1, 1, 1]} : vector<8x8x1xf32> to vector<4x8x1xf32>
    %30 = tpu.concatenate %28, %29 in 0 : vector<4x8x1xf32>, vector<4x8x1xf32> -> vector<8x8x1xf32>
    %cst_24 = arith.constant 0.923116326 : f32
    %31 = vector.broadcast %cst_24 : f32 to vector<8x8x1xf32>
    %32 = arith.mulf %31, %30 : vector<8x8x1xf32>
    %33 = arith.addf %27, %32 : vector<8x8x1xf32>
    %cst_25 = arith.constant -2.000000e-02 : f32
    %34 = vector.broadcast %cst_25 : f32 to vector<8x1x1xf32>
    %35 = arith.mulf %15, %34 : vector<8x1x1xf32>
    %36 = math.exp %35 : vector<8x1x1xf32>
    %37 = vector.broadcast %36 : vector<8x1x1xf32> to vector<8x8x1xf32>
    %38 = vector.broadcast %11 : vector<1x8x1xf32> to vector<8x8x1xf32>
    %39 = arith.mulf %37, %38 : vector<8x8x1xf32>
    %40 = arith.addf %33, %39 : vector<8x8x1xf32>
    %c0_26 = arith.constant 0 : index
    %c0_27 = arith.constant 0 : index
    %c0_28 = arith.constant 0 : index
    %41 = vector.load %arg7[%c0_26, %c0_27, %c0_28] : memref<8x8x1xf32, #tpu.memory_space<vmem>>, vector<8x8x1xf32>
    tpu.vector_store %arg7[%c0_26, %c0_27, %c0_28], %40 {strides = array<i32>} : memref<8x8x1xf32, #tpu.memory_space<vmem>>, vector<8x8x1xf32>,
    %42 = vector.extract_strided_slice %40 {offsets = [7, 0, 0], sizes = [1, 8, 1], strides = [1, 1, 1]} : vector<8x8x1xf32> to vector<1x8x1xf32>
    %c0_29 = arith.constant 0 : index
    %c0_30 = arith.constant 0 : index
    %c0_31 = arith.constant 0 : index
    %43 = vector.load %arg11[%c0_29, %c0_30, %c0_31] : memref<1x8x1xf32, #tpu.memory_space<vmem>>, vector<1x8x1xf32>
    tpu.vector_store %arg11[%c0_29, %c0_30, %c0_31], %42 {strides = array<i32>} : memref<1x8x1xf32, #tpu.memory_space<vmem>>, vector<1x8x1xf32>,
    %cst_32 = arith.constant dense<0xFF800000> : vector<8x8xf32>
    %44 = vector.multi_reduction <maximumf>, %3, %cst_32 [2] : vector<8x8x128xf32> to vector<8x8xf32>
    %45 = vector.shape_cast %44 : vector<8x8xf32> to vector<8x8x1xf32>
    %46 = vector.broadcast %45 : vector<8x8x1xf32> to vector<8x8x128xf32>
    %47 = arith.subf %3, %46 : vector<8x8x128xf32>
    %48 = math.exp %47 : vector<8x8x128xf32>
    %49 = vector.shape_cast %48 : vector<8x8x128xf32> to vector<64x128xf32>
    %c0_33 = arith.constant 0 : index
    %c0_34 = arith.constant 0 : index
    %50 = vector.load %arg4[%c0_33, %c0_34] : memref<128x128xf32, #tpu.memory_space<vmem>>, vector<128x128xf32>
    %cst_35 = arith.constant dense<0.000000e+00> : vector<64x128xf32>
    %51 = tpu.matmul %49, %50, %cst_35 {dimension_numbers = #tpu.dot_dimension_numbers<[1], [0], [0], [1], [0, 0, 1, 1], [], []>} : vector<64x128xf32>, vector<128x128xf32>, vector<64x128xf32> -> vector<64x128xf32>
    %52 = vector.shape_cast %51 : vector<64x128xf32> to vector<8x8x128xf32>
    %53 = vector.extract_strided_slice %52 {offsets = [0, 0, 127], sizes = [8, 8, 1], strides = [1, 1, 1]} : vector<8x8x128xf32> to vector<8x8x1xf32>
    %54 = math.log %53 : vector<8x8x1xf32>
    %55 = arith.addf %45, %54 : vector<8x8x1xf32>
    %56 = tpu.iota {dimensions = array<i32: 2>} : vector<8x8x128xi32>
    %57 = arith.sitofp %56 : vector<8x8x128xi32> to vector<8x8x128xf32>
    %58 = arith.mulf %7, %53 : vector<8x8x1xf32>
    %59 = vector.broadcast %58 : vector<8x8x1xf32> to vector<8x8x128xf32>
    %60 = arith.cmpf oge, %52, %59 : vector<8x8x128xf32>
    %cst_36 = arith.constant 1.280000e+02 : f32
    %61 = vector.broadcast %cst_36 : f32 to vector<8x8x128xf32>
    %62 = arith.select %60, %57, %61 : vector<8x8x128xi1>, vector<8x8x128xf32>
    %cst_37 = arith.constant dense<0x7F800000> : vector<8x8xf32>
    %63 = vector.multi_reduction <minimumf>, %62, %cst_37 [2] : vector<8x8x128xf32> to vector<8x8xf32>
    %64 = vector.shape_cast %63 : vector<8x8xf32> to vector<8x8x1xf32>
    %65 = vector.broadcast %64 : vector<8x8x1xf32> to vector<8x8x128xf32>
    %66 = arith.cmpf oeq, %57, %65 : vector<8x8x128xf32>
    %67 = arith.extui %66 : vector<8x8x128xi1> to vector<8x8x128xi32>
    %68 = arith.sitofp %67 : vector<8x8x128xi32> to vector<8x8x128xf32>
    %c0_38 = arith.constant 0 : index
    %c0_39 = arith.constant 0 : index
    %c0_40 = arith.constant 0 : index
    %69 = vector.load %arg5[%c0_38, %c0_39, %c0_40] : memref<8x8x128xf32, #tpu.memory_space<vmem>>, vector<8x8x128xf32>
    tpu.vector_store %arg5[%c0_38, %c0_39, %c0_40], %68 {strides = array<i32>} : memref<8x8x128xf32, #tpu.memory_space<vmem>>, vector<8x8x128xf32>,
    %cst_41 = arith.constant -6.90775537 : f32
    %70 = vector.broadcast %cst_41 : f32 to vector<8x8x1xf32>
    %71 = arith.addf %55, %70 : vector<8x8x1xf32>
    %72 = arith.addf %71, %9 : vector<8x8x1xf32>
    %73 = arith.addf %72, %40 : vector<8x8x1xf32>
    %c0_42 = arith.constant 0 : index
    %c0_43 = arith.constant 0 : index
    %c0_44 = arith.constant 0 : index
    %74 = vector.load %arg8[%c0_42, %c0_43, %c0_44] : memref<8x8x1xf32, #tpu.memory_space<vmem>>, vector<8x8x1xf32>
    tpu.vector_store %arg8[%c0_42, %c0_43, %c0_44], %73 {strides = array<i32>} : memref<8x8x1xf32, #tpu.memory_space<vmem>>, vector<8x8x1xf32>,
    %c0_i32_45 = arith.constant 0 : i32
    %75 = arith.index_cast %c0_i32_45 : i32 to index
    %c0_46 = arith.constant 0 : index
    %c0_47 = arith.constant 0 : index
    %76 = vector.load %arg8[%75, %c0_46, %c0_47] : memref<8x8x1xf32, #tpu.memory_space<vmem>>, vector<1x8x1xf32>
    %77 = arith.cmpf olt, %10, %76 : vector<1x8x1xf32>
    %78 = arith.extui %77 : vector<1x8x1xi1> to vector<1x8x1xi32>
    %79 = arith.sitofp %78 : vector<1x8x1xi32> to vector<1x8x1xf32>
    %80 = arith.index_cast %c0_i32_45 : i32 to index
    %c0_48 = arith.constant 0 : index
    %c0_49 = arith.constant 0 : index
    %81 = vector.load %arg9[%80, %c0_48, %c0_49] : memref<8x8x1xf32, #tpu.memory_space<vmem>>, vector<1x8x1xf32>
    tpu.vector_store %arg9[%80, %c0_48, %c0_49], %79 {strides = array<i32>} : memref<8x8x1xf32, #tpu.memory_space<vmem>>, vector<1x8x1xf32>,
    %cst_50 = arith.constant 0.000000e+00 : f32
    %82 = vector.broadcast %cst_50 : f32 to vector<1x8x1xf32>
    %83 = arith.subf %10, %82 : vector<1x8x1xf32>
    %cst_51 = arith.constant 0.818730771 : f32
    %84 = vector.broadcast %cst_51 : f32 to vector<1x8x1xf32>
    %85 = arith.mulf %83, %84 : vector<1x8x1xf32>
    %cst_52 = arith.constant 0.000000e+00 : f32
    %86 = vector.broadcast %cst_52 : f32 to vector<1x8x1xf32>
    %87 = arith.addf %86, %85 : vector<1x8x1xf32>
    %cst_53 = arith.constant 5.000000e+00 : f32
    %88 = vector.broadcast %cst_53 : f32 to vector<1x8x1xf32>
    %89 = arith.mulf %79, %88 : vector<1x8x1xf32>
    %90 = arith.addf %87, %89 : vector<1x8x1xf32>
    %c1_i32 = arith.constant 1 : i32
    %91 = arith.index_cast %c1_i32 : i32 to index
    %c0_54 = arith.constant 0 : index
    %c0_55 = arith.constant 0 : index
    %92 = vector.load %arg8[%91, %c0_54, %c0_55] : memref<8x8x1xf32, #tpu.memory_space<vmem>>, vector<1x8x1xf32>
    %93 = arith.cmpf olt, %90, %92 : vector<1x8x1xf32>
    %94 = arith.extui %93 : vector<1x8x1xi1> to vector<1x8x1xi32>
    %95 = arith.sitofp %94 : vector<1x8x1xi32> to vector<1x8x1xf32>
    %96 = arith.index_cast %c1_i32 : i32 to index
    %c0_56 = arith.constant 0 : index
    %c0_57 = arith.constant 0 : index
    %97 = vector.load %arg9[%96, %c0_56, %c0_57] : memref<8x8x1xf32, #tpu.memory_space<vmem>>, vector<1x8x1xf32>
    tpu.vector_store %arg9[%96, %c0_56, %c0_57], %95 {strides = array<i32>} : memref<8x8x1xf32, #tpu.memory_space<vmem>>, vector<1x8x1xf32>,
    %cst_58 = arith.constant 0.000000e+00 : f32
    %98 = vector.broadcast %cst_58 : f32 to vector<1x8x1xf32>
    %99 = arith.subf %90, %98 : vector<1x8x1xf32>
    %cst_59 = arith.constant 0.818730771 : f32
    %100 = vector.broadcast %cst_59 : f32 to vector<1x8x1xf32>
    %101 = arith.mulf %99, %100 : vector<1x8x1xf32>
    %cst_60 = arith.constant 0.000000e+00 : f32
    %102 = vector.broadcast %cst_60 : f32 to vector<1x8x1xf32>
    %103 = arith.addf %102, %101 : vector<1x8x1xf32>
    %cst_61 = arith.constant 5.000000e+00 : f32
    %104 = vector.broadcast %cst_61 : f32 to vector<1x8x1xf32>
    %105 = arith.mulf %95, %104 : vector<1x8x1xf32>
    %106 = arith.addf %103, %105 : vector<1x8x1xf32>
    %c2_i32 = arith.constant 2 : i32
    %107 = arith.index_cast %c2_i32 : i32 to index
    %c0_62 = arith.constant 0 : index
    %c0_63 = arith.constant 0 : index
    %108 = vector.load %arg8[%107, %c0_62, %c0_63] : memref<8x8x1xf32, #tpu.memory_space<vmem>>, vector<1x8x1xf32>
    %109 = arith.cmpf olt, %106, %108 : vector<1x8x1xf32>
    %110 = arith.extui %109 : vector<1x8x1xi1> to vector<1x8x1xi32>
    %111 = arith.sitofp %110 : vector<1x8x1xi32> to vector<1x8x1xf32>
    %112 = arith.index_cast %c2_i32 : i32 to index
    %c0_64 = arith.constant 0 : index
    %c0_65 = arith.constant 0 : index
    %113 = vector.load %arg9[%112, %c0_64, %c0_65] : memref<8x8x1xf32, #tpu.memory_space<vmem>>, vector<1x8x1xf32>
    tpu.vector_store %arg9[%112, %c0_64, %c0_65], %111 {strides = array<i32>} : memref<8x8x1xf32, #tpu.memory_space<vmem>>, vector<1x8x1xf32>,
    %cst_66 = arith.constant 0.000000e+00 : f32
    %114 = vector.broadcast %cst_66 : f32 to vector<1x8x1xf32>
    %115 = arith.subf %106, %114 : vector<1x8x1xf32>
    %cst_67 = arith.constant 0.818730771 : f32
    %116 = vector.broadcast %cst_67 : f32 to vector<1x8x1xf32>
    %117 = arith.mulf %115, %116 : vector<1x8x1xf32>
    %cst_68 = arith.constant 0.000000e+00 : f32
    %118 = vector.broadcast %cst_68 : f32 to vector<1x8x1xf32>
    %119 = arith.addf %118, %117 : vector<1x8x1xf32>
    %cst_69 = arith.constant 5.000000e+00 : f32
    %120 = vector.broadcast %cst_69 : f32 to vector<1x8x1xf32>
    %121 = arith.mulf %111, %120 : vector<1x8x1xf32>
    %122 = arith.addf %119, %121 : vector<1x8x1xf32>
    %c3_i32 = arith.constant 3 : i32
    %123 = arith.index_cast %c3_i32 : i32 to index
    %c0_70 = arith.constant 0 : index
    %c0_71 = arith.constant 0 : index
    %124 = vector.load %arg8[%123, %c0_70, %c0_71] : memref<8x8x1xf32, #tpu.memory_space<vmem>>, vector<1x8x1xf32>
    %125 = arith.cmpf olt, %122, %124 : vector<1x8x1xf32>
    %126 = arith.extui %125 : vector<1x8x1xi1> to vector<1x8x1xi32>
    %127 = arith.sitofp %126 : vector<1x8x1xi32> to vector<1x8x1xf32>
    %128 = arith.index_cast %c3_i32 : i32 to index
    %c0_72 = arith.constant 0 : index
    %c0_73 = arith.constant 0 : index
    %129 = vector.load %arg9[%128, %c0_72, %c0_73] : memref<8x8x1xf32, #tpu.memory_space<vmem>>, vector<1x8x1xf32>
    tpu.vector_store %arg9[%128, %c0_72, %c0_73], %127 {strides = array<i32>} : memref<8x8x1xf32, #tpu.memory_space<vmem>>, vector<1x8x1xf32>,
    %cst_74 = arith.constant 0.000000e+00 : f32
    %130 = vector.broadcast %cst_74 : f32 to vector<1x8x1xf32>
    %131 = arith.subf %122, %130 : vector<1x8x1xf32>
    %cst_75 = arith.constant 0.818730771 : f32
    %132 = vector.broadcast %cst_75 : f32 to vector<1x8x1xf32>
    %133 = arith.mulf %131, %132 : vector<1x8x1xf32>
    %cst_76 = arith.constant 0.000000e+00 : f32
    %134 = vector.broadcast %cst_76 : f32 to vector<1x8x1xf32>
    %135 = arith.addf %134, %133 : vector<1x8x1xf32>
    %cst_77 = arith.constant 5.000000e+00 : f32
    %136 = vector.broadcast %cst_77 : f32 to vector<1x8x1xf32>
    %137 = arith.mulf %127, %136 : vector<1x8x1xf32>
    %138 = arith.addf %135, %137 : vector<1x8x1xf32>
    %c4_i32 = arith.constant 4 : i32
    %139 = arith.index_cast %c4_i32 : i32 to index
    %c0_78 = arith.constant 0 : index
    %c0_79 = arith.constant 0 : index
    %140 = vector.load %arg8[%139, %c0_78, %c0_79] : memref<8x8x1xf32, #tpu.memory_space<vmem>>, vector<1x8x1xf32>
    %141 = arith.cmpf olt, %138, %140 : vector<1x8x1xf32>
    %142 = arith.extui %141 : vector<1x8x1xi1> to vector<1x8x1xi32>
    %143 = arith.sitofp %142 : vector<1x8x1xi32> to vector<1x8x1xf32>
    %144 = arith.index_cast %c4_i32 : i32 to index
    %c0_80 = arith.constant 0 : index
    %c0_81 = arith.constant 0 : index
    %145 = vector.load %arg9[%144, %c0_80, %c0_81] : memref<8x8x1xf32, #tpu.memory_space<vmem>>, vector<1x8x1xf32>
    tpu.vector_store %arg9[%144, %c0_80, %c0_81], %143 {strides = array<i32>} : memref<8x8x1xf32, #tpu.memory_space<vmem>>, vector<1x8x1xf32>,
    %cst_82 = arith.constant 0.000000e+00 : f32
    %146 = vector.broadcast %cst_82 : f32 to vector<1x8x1xf32>
    %147 = arith.subf %138, %146 : vector<1x8x1xf32>
    %cst_83 = arith.constant 0.818730771 : f32
    %148 = vector.broadcast %cst_83 : f32 to vector<1x8x1xf32>
    %149 = arith.mulf %147, %148 : vector<1x8x1xf32>
    %cst_84 = arith.constant 0.000000e+00 : f32
    %150 = vector.broadcast %cst_84 : f32 to vector<1x8x1xf32>
    %151 = arith.addf %150, %149 : vector<1x8x1xf32>
    %cst_85 = arith.constant 5.000000e+00 : f32
    %152 = vector.broadcast %cst_85 : f32 to vector<1x8x1xf32>
    %153 = arith.mulf %143, %152 : vector<1x8x1xf32>
    %154 = arith.addf %151, %153 : vector<1x8x1xf32>
    %c5_i32 = arith.constant 5 : i32
    %155 = arith.index_cast %c5_i32 : i32 to index
    %c0_86 = arith.constant 0 : index
    %c0_87 = arith.constant 0 : index
    %156 = vector.load %arg8[%155, %c0_86, %c0_87] : memref<8x8x1xf32, #tpu.memory_space<vmem>>, vector<1x8x1xf32>
    %157 = arith.cmpf olt, %154, %156 : vector<1x8x1xf32>
    %158 = arith.extui %157 : vector<1x8x1xi1> to vector<1x8x1xi32>
    %159 = arith.sitofp %158 : vector<1x8x1xi32> to vector<1x8x1xf32>
    %160 = arith.index_cast %c5_i32 : i32 to index
    %c0_88 = arith.constant 0 : index
    %c0_89 = arith.constant 0 : index
    %161 = vector.load %arg9[%160, %c0_88, %c0_89] : memref<8x8x1xf32, #tpu.memory_space<vmem>>, vector<1x8x1xf32>
    tpu.vector_store %arg9[%160, %c0_88, %c0_89], %159 {strides = array<i32>} : memref<8x8x1xf32, #tpu.memory_space<vmem>>, vector<1x8x1xf32>,
    %cst_90 = arith.constant 0.000000e+00 : f32
    %162 = vector.broadcast %cst_90 : f32 to vector<1x8x1xf32>
    %163 = arith.subf %154, %162 : vector<1x8x1xf32>
    %cst_91 = arith.constant 0.818730771 : f32
    %164 = vector.broadcast %cst_91 : f32 to vector<1x8x1xf32>
    %165 = arith.mulf %163, %164 : vector<1x8x1xf32>
    %cst_92 = arith.constant 0.000000e+00 : f32
    %166 = vector.broadcast %cst_92 : f32 to vector<1x8x1xf32>
    %167 = arith.addf %166, %165 : vector<1x8x1xf32>
    %cst_93 = arith.constant 5.000000e+00 : f32
    %168 = vector.broadcast %cst_93 : f32 to vector<1x8x1xf32>
    %169 = arith.mulf %159, %168 : vector<1x8x1xf32>
    %170 = arith.addf %167, %169 : vector<1x8x1xf32>
    %c6_i32 = arith.constant 6 : i32
    %171 = arith.index_cast %c6_i32 : i32 to index
    %c0_94 = arith.constant 0 : index
    %c0_95 = arith.constant 0 : index
    %172 = vector.load %arg8[%171, %c0_94, %c0_95] : memref<8x8x1xf32, #tpu.memory_space<vmem>>, vector<1x8x1xf32>
    %173 = arith.cmpf olt, %170, %172 : vector<1x8x1xf32>
    %174 = arith.extui %173 : vector<1x8x1xi1> to vector<1x8x1xi32>
    %175 = arith.sitofp %174 : vector<1x8x1xi32> to vector<1x8x1xf32>
    %176 = arith.index_cast %c6_i32 : i32 to index
    %c0_96 = arith.constant 0 : index
    %c0_97 = arith.constant 0 : index
    %177 = vector.load %arg9[%176, %c0_96, %c0_97] : memref<8x8x1xf32, #tpu.memory_space<vmem>>, vector<1x8x1xf32>
    tpu.vector_store %arg9[%176, %c0_96, %c0_97], %175 {strides = array<i32>} : memref<8x8x1xf32, #tpu.memory_space<vmem>>, vector<1x8x1xf32>,
    %cst_98 = arith.constant 0.000000e+00 : f32
    %178 = vector.broadcast %cst_98 : f32 to vector<1x8x1xf32>
    %179 = arith.subf %170, %178 : vector<1x8x1xf32>
    %cst_99 = arith.constant 0.818730771 : f32
    %180 = vector.broadcast %cst_99 : f32 to vector<1x8x1xf32>
    %181 = arith.mulf %179, %180 : vector<1x8x1xf32>
    %cst_100 = arith.constant 0.000000e+00 : f32
    %182 = vector.broadcast %cst_100 : f32 to vector<1x8x1xf32>
    %183 = arith.addf %182, %181 : vector<1x8x1xf32>
    %cst_101 = arith.constant 5.000000e+00 : f32
    %184 = vector.broadcast %cst_101 : f32 to vector<1x8x1xf32>
    %185 = arith.mulf %175, %184 : vector<1x8x1xf32>
    %186 = arith.addf %183, %185 : vector<1x8x1xf32>
    %c7_i32 = arith.constant 7 : i32
    %187 = arith.index_cast %c7_i32 : i32 to index
    %c0_102 = arith.constant 0 : index
    %c0_103 = arith.constant 0 : index
    %188 = vector.load %arg8[%187, %c0_102, %c0_103] : memref<8x8x1xf32, #tpu.memory_space<vmem>>, vector<1x8x1xf32>
    %189 = arith.cmpf olt, %186, %188 : vector<1x8x1xf32>
    %190 = arith.extui %189 : vector<1x8x1xi1> to vector<1x8x1xi32>
    %191 = arith.sitofp %190 : vector<1x8x1xi32> to vector<1x8x1xf32>
    %192 = arith.index_cast %c7_i32 : i32 to index
    %c0_104 = arith.constant 0 : index
    %c0_105 = arith.constant 0 : index
    %193 = vector.load %arg9[%192, %c0_104, %c0_105] : memref<8x8x1xf32, #tpu.memory_space<vmem>>, vector<1x8x1xf32>
    tpu.vector_store %arg9[%192, %c0_104, %c0_105], %191 {strides = array<i32>} : memref<8x8x1xf32, #tpu.memory_space<vmem>>, vector<1x8x1xf32>,
    %cst_106 = arith.constant 0.000000e+00 : f32
    %194 = vector.broadcast %cst_106 : f32 to vector<1x8x1xf32>
    %195 = arith.subf %186, %194 : vector<1x8x1xf32>
    %cst_107 = arith.constant 0.818730771 : f32
    %196 = vector.broadcast %cst_107 : f32 to vector<1x8x1xf32>
    %197 = arith.mulf %195, %196 : vector<1x8x1xf32>
    %cst_108 = arith.constant 0.000000e+00 : f32
    %198 = vector.broadcast %cst_108 : f32 to vector<1x8x1xf32>
    %199 = arith.addf %198, %197 : vector<1x8x1xf32>
    %cst_109 = arith.constant 5.000000e+00 : f32
    %200 = vector.broadcast %cst_109 : f32 to vector<1x8x1xf32>
    %201 = arith.mulf %191, %200 : vector<1x8x1xf32>
    %202 = arith.addf %199, %201 : vector<1x8x1xf32>
    %c8_i32 = arith.constant 8 : i32
    %c0_110 = arith.constant 0 : index
    %c0_111 = arith.constant 0 : index
    %c0_112 = arith.constant 0 : index
    %203 = vector.load %arg10[%c0_110, %c0_111, %c0_112] : memref<1x8x1xf32, #tpu.memory_space<vmem>>, vector<1x8x1xf32>
    tpu.vector_store %arg10[%c0_110, %c0_111, %c0_112], %202 {strides = array<i32>} : memref<1x8x1xf32, #tpu.memory_space<vmem>>, vector<1x8x1xf32>,
    %c0_113 = arith.constant 0 : index
    %c0_114 = arith.constant 0 : index
    %c0_115 = arith.constant 0 : index
    %204 = vector.load %arg9[%c0_113, %c0_114, %c0_115] : memref<8x8x1xf32, #tpu.memory_space<vmem>>, vector<8x8x1xf32>
    %cst_116 = arith.constant -2.000000e-01 : f32
    %205 = vector.broadcast %cst_116 : f32 to vector<8x1x1xf32>
    %206 = arith.mulf %15, %205 : vector<8x1x1xf32>
    %207 = math.exp %206 : vector<8x1x1xf32>
    %cst_117 = arith.constant 0.000000e+00 : f32
    %208 = vector.broadcast %cst_117 : f32 to vector<1x8x1xf32>
    %209 = arith.subf %10, %208 : vector<1x8x1xf32>
    %210 = vector.broadcast %207 : vector<8x1x1xf32> to vector<8x8x1xf32>
    %211 = vector.broadcast %209 : vector<1x8x1xf32> to vector<8x8x1xf32>
    %212 = arith.mulf %210, %211 : vector<8x8x1xf32>
    %cst_118 = arith.constant 0.000000e+00 : f32
    %213 = vector.broadcast %cst_118 : f32 to vector<8x8x1xf32>
    %214 = arith.addf %213, %212 : vector<8x8x1xf32>
    %cst_119 = arith.constant 0.000000e+00 : f32
    %215 = vector.broadcast %cst_119 : f32 to vector<1x8x1xf32>
    %216 = vector.extract_strided_slice %204 {offsets = [0, 0, 0], sizes = [7, 8, 1], strides = [1, 1, 1]} : vector<8x8x1xf32> to vector<7x8x1xf32>
    %217 = tpu.concatenate %215, %216 in 0 : vector<1x8x1xf32>, vector<7x8x1xf32> -> vector<8x8x1xf32>
    %cst_120 = arith.constant 0.818730771 : f32
    %218 = vector.broadcast %cst_120 : f32 to vector<8x8x1xf32>
    %219 = arith.mulf %218, %217 : vector<8x8x1xf32>
    %220 = arith.addf %204, %219 : vector<8x8x1xf32>
    %cst_121 = arith.constant 0.000000e+00 : f32
    %221 = vector.broadcast %cst_121 : f32 to vector<2x8x1xf32>
    %222 = vector.extract_strided_slice %220 {offsets = [0, 0, 0], sizes = [6, 8, 1], strides = [1, 1, 1]} : vector<8x8x1xf32> to vector<6x8x1xf32>
    %223 = tpu.concatenate %221, %222 in 0 : vector<2x8x1xf32>, vector<6x8x1xf32> -> vector<8x8x1xf32>
    %cst_122 = arith.constant 0.670320034 : f32
    %224 = vector.broadcast %cst_122 : f32 to vector<8x8x1xf32>
    %225 = arith.mulf %224, %223 : vector<8x8x1xf32>
    %226 = arith.addf %220, %225 : vector<8x8x1xf32>
    %cst_123 = arith.constant 0.000000e+00 : f32
    %227 = vector.broadcast %cst_123 : f32 to vector<4x8x1xf32>
    %228 = vector.extract_strided_slice %226 {offsets = [0, 0, 0], sizes = [4, 8, 1], strides = [1, 1, 1]} : vector<8x8x1xf32> to vector<4x8x1xf32>
    %229 = tpu.concatenate %227, %228 in 0 : vector<4x8x1xf32>, vector<4x8x1xf32> -> vector<8x8x1xf32>
    %cst_124 = arith.constant 0.449328959 : f32
    %230 = vector.broadcast %cst_124 : f32 to vector<8x8x1xf32>
    %231 = arith.mulf %230, %229 : vector<8x8x1xf32>
    %232 = arith.addf %226, %231 : vector<8x8x1xf32>
    %cst_125 = arith.constant 5.000000e+00 : f32
    %233 = vector.broadcast %cst_125 : f32 to vector<8x8x1xf32>
    %234 = arith.mulf %233, %232 : vector<8x8x1xf32>
    %235 = arith.addf %214, %234 : vector<8x8x1xf32>
    %c0_126 = arith.constant 0 : index
    %c0_127 = arith.constant 0 : index
    %c0_128 = arith.constant 0 : index
    %236 = vector.load %arg6[%c0_126, %c0_127, %c0_128] : memref<8x8x1xf32, #tpu.memory_space<vmem>>, vector<8x8x1xf32>
    tpu.vector_store %arg6[%c0_126, %c0_127, %c0_128], %235 {strides = array<i32>} : memref<8x8x1xf32, #tpu.memory_space<vmem>>, vector<8x8x1xf32>,
    %c0_129 = arith.constant 0 : index
    %c0_130 = arith.constant 0 : index
    %c0_131 = arith.constant 0 : index
    %237 = vector.load %arg5[%c0_129, %c0_130, %c0_131] : memref<8x8x128xf32, #tpu.memory_space<vmem>>, vector<8x8x128xf32>
    %238 = vector.broadcast %204 : vector<8x8x1xf32> to vector<8x8x128xf32>
    %239 = arith.mulf %237, %238 : vector<8x8x128xf32>
    %c0_132 = arith.constant 0 : index
    %c0_133 = arith.constant 0 : index
    %c0_134 = arith.constant 0 : index
    %240 = vector.load %arg5[%c0_132, %c0_133, %c0_134] : memref<8x8x128xf32, #tpu.memory_space<vmem>>, vector<8x8x128xf32>
    tpu.vector_store %arg5[%c0_132, %c0_133, %c0_134], %239 {strides = array<i32>} : memref<8x8x128xf32, #tpu.memory_space<vmem>>, vector<8x8x128xf32>,
    return
  }
  func.func @transform_0(%arg0: i32, %arg1: i32) -> (i32, i32, i32) {
    %c0_i32 = arith.constant 0 : i32
    %c0_i32_0 = arith.constant 0 : i32
    return %arg1, %arg0, %c0_i32 : i32, i32, i32
  }
  func.func @transform_1(%arg0: i32, %arg1: i32) -> (i32, i32, i32, i32) {
    %c0_i32 = arith.constant 0 : i32
    %c0_i32_0 = arith.constant 0 : i32
    %c0_i32_1 = arith.constant 0 : i32
    return %c0_i32, %arg1, %arg0, %c0_i32_0 : i32, i32, i32, i32
  }
  func.func @transform_2(%arg0: i32, %arg1: i32) -> (i32, i32) {
    %c0_i32 = arith.constant 0 : i32
    %c0_i32_0 = arith.constant 0 : i32
    %c0_i32_1 = arith.constant 0 : i32
    return %c0_i32, %c0_i32_0 : i32, i32
  }
  func.func @transform_3(%arg0: i32, %arg1: i32) -> (i32, i32, i32) {
    %c0_i32 = arith.constant 0 : i32
    %c0_i32_0 = arith.constant 0 : i32
    return %arg1, %arg0, %c0_i32 : i32, i32, i32
  }
  func.func @transform_4(%arg0: i32, %arg1: i32) -> (i32, i32, i32) {
    %c0_i32 = arith.constant 0 : i32
    %c0_i32_0 = arith.constant 0 : i32
    return %arg1, %arg0, %c0_i32 : i32, i32, i32
  }
  func.func @transform_5(%arg0: i32, %arg1: i32) -> (i32, i32, i32) {
    %c0_i32 = arith.constant 0 : i32
    %c0_i32_0 = arith.constant 0 : i32
    return %arg1, %arg0, %c0_i32 : i32, i32, i32
  }
}

</mosaic_0001>

<llo_original>
// kernel: tpu_custom_call.1
$region0: #{tpu_custom_call.1}
  #allocation0 [shape = 'u32[]', space=smem, size = 0x4, offset = 0x4, fixed_abs, tag = 'smem constant byte address 0x4 - core index']
  #allocation1 [shape = 'u32[144,128]{1,0:T(1,128)}', space=vmem, size = 0x12000, scoped, tag = 'internal scratch']
  #allocation2 [shape = 'f32[8,8,1]{2,1,0:T(8,128)}', space=vmem, size = 0x8000, scoped, tag = 'scratch operand']
  #allocation3 [shape = 'f32[8,8,1]{2,1,0:T(8,128)}', space=vmem, size = 0x8000, scoped, tag = 'scratch operand']
  #allocation4 [shape = 'f32[1,8,1]{2,1,0:T(8,128)}', space=vmem, size = 0x1000, scoped, tag = 'scratch operand']
  #allocation5 [shape = 'f32[1,8,1]{2,1,0:T(8,128)}', space=vmem, size = 0x1000, scoped, tag = 'scratch operand']
  %s0 = inlined_call_operand.vmem [shape: f32[24,16,128], index: 0, kind: input, shape index: {}]
  %s1 = inlined_call_operand.vmem [shape: f32[3,24,16,1], index: 1, kind: input, shape index: {}]
  %s2 = inlined_call_operand.vmem [shape: f32[128,128], index: 2, kind: input, shape index: {}]
  %s3 = inlined_call_operand.hbm [shape: f32[24,16,128], index: 3, kind: output, shape index: {0}]
  %s4 = inlined_call_operand.vmem [shape: f32[24,16,1], index: 4, kind: output, shape index: {1}]
  %s5 = inlined_call_operand.vmem [shape: f32[24,16,1], index: 5, kind: output, shape index: {2}]
  %6 = xla_tuple %s3, %s4, %s5
  %s7 = sld [smem:[#allocation0]]
  $region209: #{tpu_custom_call.1} parent=0
    _
  %s9 = ssub.s32 1, %s7
  %s10 = scalar_select 0, %s9, %s7
  $region1: #{tpu_custom_call.1} parent=0
    #allocation6 [shape = 'u8[65536]{0}', space=vmem, size = 0x10000, scoped, tag = 'input window, operand 0']
    #allocation7 [shape = 'u8[196608]{0}', space=vmem, size = 0x30000, scoped, tag = 'input window, operand 1']
    #allocation8 [shape = 'u8[65536]{0}', space=vmem, size = 0x10000, scoped, tag = 'output window, operand 0']
    #allocation9 [shape = 's32[2]{0}', space=sflag, size = 0x8, scoped, tag = 'scoped memory for tpu_custom_call.1']
    #allocation10 [shape = 'u8[65536]{0}', space=vmem, size = 0x10000, scoped, tag = 'output window, operand 1']
    #allocation11 [shape = 'u8[65536]{0}', space=vmem, size = 0x10000, scoped, tag = 'output window, operand 2']
    %11 = vsyncpa [#allocation9], 0
    %s12 = scalar_lea.sflag [#allocation9], 1
    %13 = vsyncpa %s12, 0
    loop: start=0, step=1, limit=8
    $region2: #{tpu_custom_call.1} parent=1 // loop_pre_header
      _
    $region3: #{tpu_custom_call.1} parent=1 // loop_header
      %s15 = sphi 0, %s19
      %p16 = scmp.ge.s32.totalorder %s15, 8
      %s22 = sphi 0, %s34
      %s23 = sphi 0, %s30
      %s24 = sphi 0, %s22
      %s25 = sphi 0, %s23
      %s26 = sphi 0, %s24
      %s27 = sphi 0, %s25
      %s39 = sphi 0, %s41
      %s42 = sphi 0, %s39
      %s43 = sphi 0, %s42
      %s59 = sphi 0, %s43
      %s67 = sphi 0, %s69
      %s70 = sphi 0, %s67
      %s71 = sphi 0, %s70
      %s87 = sphi 0, %s71
      %s91 = sphi 0, %s91
      %s93 = sphi 0, %s91
      %s94 = sphi 0, %s93
      %s108 = sphi 0, %s94
      %s116 = sphi 0, %s118
      %s119 = sphi 0, %s116
      %s120 = sphi 0, %s119
      %s136 = sphi 0, %s120
      %s144 = sphi 0, %s146
      %s147 = sphi 0, %s144
      %s148 = sphi 0, %s147
      %s164 = sphi 0, %s148
      %s172 = sphi 0, %s174
      %s175 = sphi 0, %s172
      %s176 = sphi 0, %s175
      %s192 = sphi 0, %s176
    $region4: #{tpu_custom_call.1} parent=1 // loop_header_branch
      %18 = sbr.rel (%p16) target = $region8
    $region5: #{tpu_custom_call.1} parent=1 // loop_body
      %s20 = ssub.s32 %s15, 1
      %s21 = ssub.s32 %s15, 2
      %s28 = sadd.s32 1, %s23
      %p29 = scmp.ge.s32.totalorder %s28, 3
      %s30 = scalar_select %p29, 0, %s28
      %s31 = sadd.s32 1, %s22
      %s32 = scalar_select %p29, %s31, %s22
      %p33 = scmp.ge.s32.totalorder %s32, 2
      %s34 = scalar_select %p33, 0, %s32
      %s35 = ssub.s32 %s23, %s30
      %s36 = ssub.s32 %s22, %s34
      %s37 = sor.u32 %s35, %s36
      %p38 = scmp.eq.s32.totalorder %s37, 0
      %s40 = sadd.s32 %s39, 1
      %s41 = scalar_select %p38, %s39, %s40
      %p44 = pneg %p38
      %p45 = scmp.eq.s32.totalorder %s15, 5
      %p46 = por %p44, %p45
      %p47 = scmp.ne.s32.totalorder %s39, %s42
      %p48 = scmp.eq.s32.totalorder %s15, 0
      %p49 = por %p47, %p48
      %p50 = scmp.ne.s32.totalorder %s39, %s42
      %p51 = scmp.eq.s32.totalorder %s20, 5
      %p52 = por %p50, %p51
      %p53 = scmp.ne.s32.totalorder %s42, %s43
      %p54 = scmp.eq.s32.totalorder %s20, 0
      %p55 = por %p53, %p54
      %p56 = scmp.ne.s32.totalorder %s42, %s43
      %p57 = scmp.eq.s32.totalorder %s21, 5
      %p58 = por %p56, %p57
      %p60 = scmp.ne.s32.totalorder %s43, %s59
      %p61 = scmp.eq.s32.totalorder %s21, 0
      %p62 = por %p60, %p61
      %s63 = ssub.s32 %s23, %s30
      %s64 = ssub.s32 %s22, %s34
      %s65 = sor.u32 %s63, %s64
      %p66 = scmp.eq.s32.totalorder %s65, 0
      %s68 = sadd.s32 %s67, 1
      %s69 = scalar_select %p66, %s67, %s68
      %p72 = pneg %p66
      %p73 = scmp.eq.s32.totalorder %s15, 5
      %p74 = por %p72, %p73
      %p75 = scmp.ne.s32.totalorder %s67, %s70
      %p76 = scmp.eq.s32.totalorder %s15, 0
      %p77 = por %p75, %p76
      %p78 = scmp.ne.s32.totalorder %s67, %s70
      %p79 = scmp.eq.s32.totalorder %s20, 5
      %p80 = por %p78, %p79
      %p81 = scmp.ne.s32.totalorder %s70, %s71
      %p82 = scmp.eq.s32.totalorder %s20, 0
      %p83 = por %p81, %p82
      %p84 = scmp.ne.s32.totalorder %s70, %s71
      %p85 = scmp.eq.s32.totalorder %s21, 5
      %p86 = por %p84, %p85
      %p88 = scmp.ne.s32.totalorder %s71, %s87
      %p89 = scmp.eq.s32.totalorder %s21, 0
      %p90 = por %p88, %p89
      %s92 = sadd.s32 %s91, 1
      %p95 = scmp.eq.s32.totalorder %s15, 5
      %p96 = scmp.ne.s32.totalorder %s91, %s93
      %p97 = scmp.eq.s32.totalorder %s15, 0
      %p98 = por %p96, %p97
      %p99 = scmp.ne.s32.totalorder %s91, %s93
      %p100 = scmp.eq.s32.totalorder %s20, 5
      %p101 = por %p99, %p100
      %p102 = scmp.ne.s32.totalorder %s93, %s94
      %p103 = scmp.eq.s32.totalorder %s20, 0
      %p104 = por %p102, %p103
      %p105 = scmp.ne.s32.totalorder %s93, %s94
      %p106 = scmp.eq.s32.totalorder %s21, 5
      %p107 = por %p105, %p106
      %p109 = scmp.ne.s32.totalorder %s94, %s108
      %p110 = scmp.eq.s32.totalorder %s21, 0
      %p111 = por %p109, %p110
      %s112 = ssub.s32 %s23, %s30
      %s113 = ssub.s32 %s22, %s34
      %s114 = sor.u32 %s112, %s113
      %p115 = scmp.eq.s32.totalorder %s114, 0
      %s117 = sadd.s32 %s116, 1
      %s118 = scalar_select %p115, %s116, %s117
      %p121 = pneg %p115
      %p122 = scmp.eq.s32.totalorder %s15, 5
      %p123 = por %p121, %p122
      %p124 = scmp.ne.s32.totalorder %s116, %s119
      %p125 = scmp.eq.s32.totalorder %s15, 0
      %p126 = por %p124, %p125
      %p127 = scmp.ne.s32.totalorder %s116, %s119
      %p128 = scmp.eq.s32.totalorder %s20, 5
      %p129 = por %p127, %p128
      %p130 = scmp.ne.s32.totalorder %s119, %s120
      %p131 = scmp.eq.s32.totalorder %s20, 0
      %p132 = por %p130, %p131
      %p133 = scmp.ne.s32.totalorder %s119, %s120
      %p134 = scmp.eq.s32.totalorder %s21, 5
      %p135 = por %p133, %p134
      %p137 = scmp.ne.s32.totalorder %s120, %s136
      %p138 = scmp.eq.s32.totalorder %s21, 0
      %p139 = por %p137, %p138
      %s140 = ssub.s32 %s23, %s30
      %s141 = ssub.s32 %s22, %s34
      %s142 = sor.u32 %s140, %s141
      %p143 = scmp.eq.s32.totalorder %s142, 0
      %s145 = sadd.s32 %s144, 1
      %s146 = scalar_select %p143, %s144, %s145
      %p149 = pneg %p143
      %p150 = scmp.eq.s32.totalorder %s15, 5
      %p151 = por %p149, %p150
      %p152 = scmp.ne.s32.totalorder %s144, %s147
      %p153 = scmp.eq.s32.totalorder %s15, 0
      %p154 = por %p152, %p153
      %p155 = scmp.ne.s32.totalorder %s144, %s147
      %p156 = scmp.eq.s32.totalorder %s20, 5
      %p157 = por %p155, %p156
      %p158 = scmp.ne.s32.totalorder %s147, %s148
      %p159 = scmp.eq.s32.totalorder %s20, 0
      %p160 = por %p158, %p159
      %p161 = scmp.ne.s32.totalorder %s147, %s148
      %p162 = scmp.eq.s32.totalorder %s21, 5
      %p163 = por %p161, %p162
      %p165 = scmp.ne.s32.totalorder %s148, %s164
      %p166 = scmp.eq.s32.totalorder %s21, 0
      %p167 = por %p165, %p166
      %s168 = ssub.s32 %s23, %s30
      %s169 = ssub.s32 %s22, %s34
      %s170 = sor.u32 %s168, %s169
      %p171 = scmp.eq.s32.totalorder %s170, 0
      %s173 = sadd.s32 %s172, 1
      %s174 = scalar_select %p171, %s172, %s173
      %p177 = pneg %p171
      %p178 = scmp.eq.s32.totalorder %s15, 5
      %p179 = por %p177, %p178
      %p180 = scmp.ne.s32.totalorder %s172, %s175
      %p181 = scmp.eq.s32.totalorder %s15, 0
      %p182 = por %p180, %p181
      %p183 = scmp.ne.s32.totalorder %s172, %s175
      %p184 = scmp.eq.s32.totalorder %s20, 5
      %p185 = por %p183, %p184
      %p186 = scmp.ne.s32.totalorder %s175, %s176
      %p187 = scmp.eq.s32.totalorder %s20, 0
      %p188 = por %p186, %p187
      %p189 = scmp.ne.s32.totalorder %s175, %s176
      %p190 = scmp.eq.s32.totalorder %s21, 5
      %p191 = por %p189, %p190
      %p193 = scmp.ne.s32.totalorder %s176, %s192
      %p194 = scmp.eq.s32.totalorder %s21, 0
      %p195 = por %p193, %p194
      %p196 = scmp.le.s32.totalorder 1, %s15
      %p197 = scmp.lt.s32.totalorder %s15, 7
      %p198 = pnand %p196, %p197
      %p199 = pneg %p198
      // Predicated region
      $region9: #{tpu_custom_call.1} parent=5 // pred_check
        _
      $region10: #{tpu_custom_call.1} parent=5 // pred_check_branch
        %201 = sbr.rel (%p198) target = $region12
      $region11: #{tpu_custom_call.1} parent=5 // pred_region
        %s202 = ssub.s32 %s15, 1
        // Predicated region
        $region13: #{tpu_custom_call.1} parent=11 // pred_check
          %p203 = pneg %p104
        $region14: #{tpu_custom_call.1} parent=11 // pred_check_branch
          %205 = sbr.rel (%p203) target = $region16
        $region15: #{tpu_custom_call.1} parent=11 // pred_region
          _
        $region16: #{tpu_custom_call.1} parent=11 // pred_fallthru
          _
      $region12: #{tpu_custom_call.1} parent=5 // pred_fallthru
        _
      %p206 = scmp.lt.s32.totalorder %s15, 6
      // Predicated region
      $region17: #{tpu_custom_call.1} parent=5 // pred_check
        %p207 = pneg %p206
      $region18: #{tpu_custom_call.1} parent=5 // pred_check_branch
        %209 = sbr.rel (%p207) target = $region20
      $region19: #{tpu_custom_call.1} parent=5 // pred_region
        // Predicated region
        $region21: #{tpu_custom_call.1} parent=19 // pred_check
          %p210 = pneg %p49
        $region22: #{tpu_custom_call.1} parent=19 // pred_check_branch
          %212 = sbr.rel (%p210) target = $region24
        $region23: #{tpu_custom_call.1} parent=19 // pred_region
          %s213 = sand.u32 %s39, 1
          %s214 = sand.u32 %s39, 1
          %s215 = smul.addr %s214, 64
          %s216 = scalar_lea.vmem [#allocation6], %s215
          %s217 = smul.u32 8, %s23
          %s218 = smul.addr %s217, 2
          %s219 = sadd.s32 %s22, %s218
          %s220 = smul.addr %s219, 8
          %s221 = scalar_lea.vmem %s0, %s220
          // Predicated region
          $region25: #{tpu_custom_call.1} parent=23 // pred_check
            _
          $region26: #{tpu_custom_call.1} parent=23 // pred_check_branch
            %223 = sbr.rel (0) target = $region28
          $region27: #{tpu_custom_call.1} parent=23 // pred_region
            // Predicated region
            $region29: #{tpu_custom_call.1} parent=27 // pred_check
              _
            $region30: #{tpu_custom_call.1} parent=27 // pred_check_branch
              %225 = sbr.rel (0) target = $region32
            $region31: #{tpu_custom_call.1} parent=27 // pred_region
              // Predicated region
              $region44: #{tpu_custom_call.1} parent=31 // pred_check
                _
              $region45: #{tpu_custom_call.1} parent=31 // pred_check_branch
                %254 = sbr.rel (0) target = $region47
              $region46: #{tpu_custom_call.1} parent=31 // pred_region
                loop: start=0, step=1, limit=1
                $region48: #{tpu_custom_call.1} parent=46 // loop_pre_header
                  _
                $region49: #{tpu_custom_call.1} parent=46 // loop_header
                  %s256 = sphi 0, %s260
                  %p257 = scmp.ge.s32.totalorder %s256, 1
                  %s261 = sphi %s221, %s221
                  %s262 = sphi %s216, %s216
                $region50: #{tpu_custom_call.1} parent=46 // loop_header_branch
                  %259 = sbr.rel (%p257) target = $region54
                $region51: #{tpu_custom_call.1} parent=46 // loop_body
                  %v263 = vld [vmem:[%s261] sm:$0xff]
                  %264 = vst [vmem:[%s262] sm:$0xff] %v263
                  %v265 = vld [vmem:[%s261 + $0x10] sm:$0xff]
                  %266 = vst [vmem:[%s262 + $0x8] sm:$0xff] %v265
                  %v267 = vld [vmem:[%s261 + $0x20] sm:$0xff]
                  %268 = vst [vmem:[%s262 + $0x10] sm:$0xff] %v267
                  %v269 = vld [vmem:[%s261 + $0x30] sm:$0xff]
                  %270 = vst [vmem:[%s262 + $0x18] sm:$0xff] %v269
                  %v271 = vld [vmem:[%s261 + $0x40] sm:$0xff]
                  %272 = vst [vmem:[%s262 + $0x20] sm:$0xff] %v271
                  %v273 = vld [vmem:[%s261 + $0x50] sm:$0xff]
                  %274 = vst [vmem:[%s262 + $0x28] sm:$0xff] %v273
                  %v275 = vld [vmem:[%s261 + $0x60] sm:$0xff]
                  %276 = vst [vmem:[%s262 + $0x30] sm:$0xff] %v275
                  %v277 = vld [vmem:[%s261 + $0x70] sm:$0xff]
                  %278 = vst [vmem:[%s262 + $0x38] sm:$0xff] %v277
                $region52: #{tpu_custom_call.1} parent=46 // loop_footer
                  %s260 = sadd.s32 1, %s256
                $region53: #{tpu_custom_call.1} parent=46 // loop_footer_branch
                  %255 = sbr.rel target = $region49
                $region54: #{tpu_custom_call.1} parent=46 // loop_exit
                  _
              $region47: #{tpu_custom_call.1} parent=31 // pred_fallthru
                _
              // Predicated region
              $region55: #{tpu_custom_call.1} parent=31 // pred_check
                _
              $region56: #{tpu_custom_call.1} parent=31 // pred_check_branch
                %280 = sbr.rel target = $region58
              $region57: #{tpu_custom_call.1} parent=31 // pred_region
                _
              $region58: #{tpu_custom_call.1} parent=31 // pred_fallthru
                _
            $region32: #{tpu_custom_call.1} parent=27 // pred_fallthru
              _
            // Predicated region
            $region33: #{tpu_custom_call.1} parent=27 // pred_check
              _
            $region34: #{tpu_custom_call.1} parent=27 // pred_check_branch
              %227 = sbr.rel target = $region36
            $region35: #{tpu_custom_call.1} parent=27 // pred_region
              loop: start=0, step=1, limit=1
              $region37: #{tpu_custom_call.1} parent=35 // loop_pre_header
                _
              $region38: #{tpu_custom_call.1} parent=35 // loop_header
                %s230 = sphi 0, %s234
                %p231 = scmp.ge.s32.totalorder %s230, 1
                %s235 = sphi %s221, %s221
                %s236 = sphi %s216, %s216
              $region39: #{tpu_custom_call.1} parent=35 // loop_header_branch
                %233 = sbr.rel (%p231) target = $region43
              $region40: #{tpu_custom_call.1} parent=35 // loop_body
                %v237 = vld [vmem:[%s235] sm:$0xff]
                %238 = vst [vmem:[%s236] sm:$0xff] %v237
                %v239 = vld [vmem:[%s235 + $0x10] sm:$0xff]
                %240 = vst [vmem:[%s236 + $0x8] sm:$0xff] %v239
                %v241 = vld [vmem:[%s235 + $0x20] sm:$0xff]
                %242 = vst [vmem:[%s236 + $0x10] sm:$0xff] %v241
                %v243 = vld [vmem:[%s235 + $0x30] sm:$0xff]
                %244 = vst [vmem:[%s236 + $0x18] sm:$0xff] %v243
                %v245 = vld [vmem:[%s235 + $0x40] sm:$0xff]
                %246 = vst [vmem:[%s236 + $0x20] sm:$0xff] %v245
                %v247 = vld [vmem:[%s235 + $0x50] sm:$0xff]
                %248 = vst [vmem:[%s236 + $0x28] sm:$0xff] %v247
                %v249 = vld [vmem:[%s235 + $0x60] sm:$0xff]
                %250 = vst [vmem:[%s236 + $0x30] sm:$0xff] %v249
                %v251 = vld [vmem:[%s235 + $0x70] sm:$0xff]
                %252 = vst [vmem:[%s236 + $0x38] sm:$0xff] %v251
              $region41: #{tpu_custom_call.1} parent=35 // loop_footer
                %s234 = sadd.s32 1, %s230
              $region42: #{tpu_custom_call.1} parent=35 // loop_footer_branch
                %229 = sbr.rel target = $region38
              $region43: #{tpu_custom_call.1} parent=35 // loop_exit
                _
            $region36: #{tpu_custom_call.1} parent=27 // pred_fallthru
              _
          $region28: #{tpu_custom_call.1} parent=23 // pred_fallthru
            _
          %281 = vnop
        $region24: #{tpu_custom_call.1} parent=19 // pred_fallthru
          _
        // Predicated region
        $region59: #{tpu_custom_call.1} parent=19 // pred_check
          %p282 = pneg %p77
        $region60: #{tpu_custom_call.1} parent=19 // pred_check_branch
          %284 = sbr.rel (%p282) target = $region62
        $region61: #{tpu_custom_call.1} parent=19 // pred_region
          %s285 = sand.u32 %s67, 1
          %s286 = sand.u32 %s67, 1
          %s287 = smul.addr %s286, 192
          %s288 = scalar_lea.vmem [#allocation7], %s287
          %s289 = smul.u32 8, %s23
          %s290 = smul.addr %s289, 2
          %s291 = sadd.s32 %s22, %s290
          %s292 = smul.addr %s291, 8
          %s293 = scalar_lea.vmem %s1, %s292
          // Predicated region
          $region63: #{tpu_custom_call.1} parent=61 // pred_check
            _
          $region64: #{tpu_custom_call.1} parent=61 // pred_check_branch
            %295 = sbr.rel (0) target = $region66
          $region65: #{tpu_custom_call.1} parent=61 // pred_region
            // Predicated region
            $region67: #{tpu_custom_call.1} parent=65 // pred_check
              _
            $region68: #{tpu_custom_call.1} parent=65 // pred_check_branch
              %297 = sbr.rel (0) target = $region70
            $region69: #{tpu_custom_call.1} parent=65 // pred_region
              // Predicated region
              $region82: #{tpu_custom_call.1} parent=69 // pred_check
                _
              $region83: #{tpu_custom_call.1} parent=69 // pred_check_branch
                %358 = sbr.rel (0) target = $region85
              $region84: #{tpu_custom_call.1} parent=69 // pred_region
                loop: start=0, step=1, limit=1
                $region86: #{tpu_custom_call.1} parent=84 // loop_pre_header
                  _
                $region87: #{tpu_custom_call.1} parent=84 // loop_header
                  %s360 = sphi 0, %s364
                  %p361 = scmp.ge.s32.totalorder %s360, 1
                  %s365 = sphi %s293, %s293
                  %s366 = sphi %s288, %s288
                $region88: #{tpu_custom_call.1} parent=84 // loop_header_branch
                  %363 = sbr.rel (%p361) target = $region92
                $region89: #{tpu_custom_call.1} parent=84 // loop_body
                  %v367 = vld [vmem:[%s365] sm:$0xff]
                  %368 = vst [vmem:[%s366] sm:$0xff] %v367
                  %v369 = vld [vmem:[%s365 + $0x10] sm:$0xff]
                  %370 = vst [vmem:[%s366 + $0x8] sm:$0xff] %v369
                  %v371 = vld [vmem:[%s365 + $0x20] sm:$0xff]
                  %372 = vst [vmem:[%s366 + $0x10] sm:$0xff] %v371
                  %v373 = vld [vmem:[%s365 + $0x30] sm:$0xff]
                  %374 = vst [vmem:[%s366 + $0x18] sm:$0xff] %v373
                  %v375 = vld [vmem:[%s365 + $0x40] sm:$0xff]
                  %376 = vst [vmem:[%s366 + $0x20] sm:$0xff] %v375
                  %v377 = vld [vmem:[%s365 + $0x50] sm:$0xff]
                  %378 = vst [vmem:[%s366 + $0x28] sm:$0xff] %v377
                  %v379 = vld [vmem:[%s365 + $0x60] sm:$0xff]
                  %380 = vst [vmem:[%s366 + $0x30] sm:$0xff] %v379
                  %v381 = vld [vmem:[%s365 + $0x70] sm:$0xff]
                  %382 = vst [vmem:[%s366 + $0x38] sm:$0xff] %v381
                  %v383 = vld [vmem:[%s365 + $0x180] sm:$0xff]
                  %384 = vst [vmem:[%s366 + $0x40] sm:$0xff] %v383
                  %v385 = vld [vmem:[%s365 + $0x190] sm:$0xff]
                  %386 = vst [vmem:[%s366 + $0x48] sm:$0xff] %v385
                  %v387 = vld [vmem:[%s365 + $0x1a0] sm:$0xff]
                  %388 = vst [vmem:[%s366 + $0x50] sm:$0xff] %v387
                  %v389 = vld [vmem:[%s365 + $0x1b0] sm:$0xff]
                  %390 = vst [vmem:[%s366 + $0x58] sm:$0xff] %v389
                  %v391 = vld [vmem:[%s365 + $0x1c0] sm:$0xff]
                  %392 = vst [vmem:[%s366 + $0x60] sm:$0xff] %v391
                  %v393 = vld [vmem:[%s365 + $0x1d0] sm:$0xff]
                  %394 = vst [vmem:[%s366 + $0x68] sm:$0xff] %v393
                  %v395 = vld [vmem:[%s365 + $0x1e0] sm:$0xff]
                  %396 = vst [vmem:[%s366 + $0x70] sm:$0xff] %v395
                  %v397 = vld [vmem:[%s365 + $0x1f0] sm:$0xff]
                  %398 = vst [vmem:[%s366 + $0x78] sm:$0xff] %v397
                  %v399 = vld [vmem:[%s365 + $0x300] sm:$0xff]
                  %400 = vst [vmem:[%s366 + $0x80] sm:$0xff] %v399
                  %v401 = vld [vmem:[%s365 + $0x310] sm:$0xff]
                  %402 = vst [vmem:[%s366 + $0x88] sm:$0xff] %v401
                  %v403 = vld [vmem:[%s365 + $0x320] sm:$0xff]
                  %404 = vst [vmem:[%s366 + $0x90] sm:$0xff] %v403
                  %v405 = vld [vmem:[%s365 + $0x330] sm:$0xff]
                  %406 = vst [vmem:[%s366 + $0x98] sm:$0xff] %v405
                  %v407 = vld [vmem:[%s365 + $0x340] sm:$0xff]
                  %408 = vst [vmem:[%s366 + $0xa0] sm:$0xff] %v407
                  %v409 = vld [vmem:[%s365 + $0x350] sm:$0xff]
                  %410 = vst [vmem:[%s366 + $0xa8] sm:$0xff] %v409
                  %v411 = vld [vmem:[%s365 + $0x360] sm:$0xff]
                  %412 = vst [vmem:[%s366 + $0xb0] sm:$0xff] %v411
                  %v413 = vld [vmem:[%s365 + $0x370] sm:$0xff]
                  %414 = vst [vmem:[%s366 + $0xb8] sm:$0xff] %v413
                $region90: #{tpu_custom_call.1} parent=84 // loop_footer
                  %s364 = sadd.s32 1, %s360
                $region91: #{tpu_custom_call.1} parent=84 // loop_footer_branch
                  %359 = sbr.rel target = $region87
                $region92: #{tpu_custom_call.1} parent=84 // loop_exit
                  _
              $region85: #{tpu_custom_call.1} parent=69 // pred_fallthru
                _
              // Predicated region
              $region93: #{tpu_custom_call.1} parent=69 // pred_check
                _
              $region94: #{tpu_custom_call.1} parent=69 // pred_check_branch
                %416 = sbr.rel target = $region96
              $region95: #{tpu_custom_call.1} parent=69 // pred_region
                _
              $region96: #{tpu_custom_call.1} parent=69 // pred_fallthru
                _
            $region70: #{tpu_custom_call.1} parent=65 // pred_fallthru
              _
            // Predicated region
            $region71: #{tpu_custom_call.1} parent=65 // pred_check
              _
            $region72: #{tpu_custom_call.1} parent=65 // pred_check_branch
              %299 = sbr.rel target = $region74
            $region73: #{tpu_custom_call.1} parent=65 // pred_region
              loop: start=0, step=1, limit=1
              $region75: #{tpu_custom_call.1} parent=73 // loop_pre_header
                _
              $region76: #{tpu_custom_call.1} parent=73 // loop_header
                %s302 = sphi 0, %s306
                %p303 = scmp.ge.s32.totalorder %s302, 1
                %s307 = sphi %s293, %s293
                %s308 = sphi %s288, %s288
              $region77: #{tpu_custom_call.1} parent=73 // loop_header_branch
                %305 = sbr.rel (%p303) target = $region81
              $region78: #{tpu_custom_call.1} parent=73 // loop_body
                %v309 = vld [vmem:[%s307] sm:$0xff]
                %310 = vst [vmem:[%s308] sm:$0xff] %v309
                %v311 = vld [vmem:[%s307 + $0x10] sm:$0xff]
                %312 = vst [vmem:[%s308 + $0x8] sm:$0xff] %v311
                %v313 = vld [vmem:[%s307 + $0x20] sm:$0xff]
                %314 = vst [vmem:[%s308 + $0x10] sm:$0xff] %v313
                %v315 = vld [vmem:[%s307 + $0x30] sm:$0xff]
                %316 = vst [vmem:[%s308 + $0x18] sm:$0xff] %v315
                %v317 = vld [vmem:[%s307 + $0x40] sm:$0xff]
                %318 = vst [vmem:[%s308 + $0x20] sm:$0xff] %v317
                %v319 = vld [vmem:[%s307 + $0x50] sm:$0xff]
                %320 = vst [vmem:[%s308 + $0x28] sm:$0xff] %v319
                %v321 = vld [vmem:[%s307 + $0x60] sm:$0xff]
                %322 = vst [vmem:[%s308 + $0x30] sm:$0xff] %v321
                %v323 = vld [vmem:[%s307 + $0x70] sm:$0xff]
                %324 = vst [vmem:[%s308 + $0x38] sm:$0xff] %v323
                %v325 = vld [vmem:[%s307 + $0x180] sm:$0xff]
                %326 = vst [vmem:[%s308 + $0x40] sm:$0xff] %v325
                %v327 = vld [vmem:[%s307 + $0x190] sm:$0xff]
                %328 = vst [vmem:[%s308 + $0x48] sm:$0xff] %v327
                %v329 = vld [vmem:[%s307 + $0x1a0] sm:$0xff]
                %330 = vst [vmem:[%s308 + $0x50] sm:$0xff] %v329
                %v331 = vld [vmem:[%s307 + $0x1b0] sm:$0xff]
                %332 = vst [vmem:[%s308 + $0x58] sm:$0xff] %v331
                %v333 = vld [vmem:[%s307 + $0x1c0] sm:$0xff]
                %334 = vst [vmem:[%s308 + $0x60] sm:$0xff] %v333
                %v335 = vld [vmem:[%s307 + $0x1d0] sm:$0xff]
                %336 = vst [vmem:[%s308 + $0x68] sm:$0xff] %v335
                %v337 = vld [vmem:[%s307 + $0x1e0] sm:$0xff]
                %338 = vst [vmem:[%s308 + $0x70] sm:$0xff] %v337
                %v339 = vld [vmem:[%s307 + $0x1f0] sm:$0xff]
                %340 = vst [vmem:[%s308 + $0x78] sm:$0xff] %v339
                %v341 = vld [vmem:[%s307 + $0x300] sm:$0xff]
                %342 = vst [vmem:[%s308 + $0x80] sm:$0xff] %v341
                %v343 = vld [vmem:[%s307 + $0x310] sm:$0xff]
                %344 = vst [vmem:[%s308 + $0x88] sm:$0xff] %v343
                %v345 = vld [vmem:[%s307 + $0x320] sm:$0xff]
                %346 = vst [vmem:[%s308 + $0x90] sm:$0xff] %v345
                %v347 = vld [vmem:[%s307 + $0x330] sm:$0xff]
                %348 = vst [vmem:[%s308 + $0x98] sm:$0xff] %v347
                %v349 = vld [vmem:[%s307 + $0x340] sm:$0xff]
                %350 = vst [vmem:[%s308 + $0xa0] sm:$0xff] %v349
                %v351 = vld [vmem:[%s307 + $0x350] sm:$0xff]
                %352 = vst [vmem:[%s308 + $0xa8] sm:$0xff] %v351
                %v353 = vld [vmem:[%s307 + $0x360] sm:$0xff]
                %354 = vst [vmem:[%s308 + $0xb0] sm:$0xff] %v353
                %v355 = vld [vmem:[%s307 + $0x370] sm:$0xff]
                %356 = vst [vmem:[%s308 + $0xb8] sm:$0xff] %v355
              $region79: #{tpu_custom_call.1} parent=73 // loop_footer
                %s306 = sadd.s32 1, %s302
              $region80: #{tpu_custom_call.1} parent=73 // loop_footer_branch
                %301 = sbr.rel target = $region76
              $region81: #{tpu_custom_call.1} parent=73 // loop_exit
                _
            $region74: #{tpu_custom_call.1} parent=65 // pred_fallthru
              _
          $region66: #{tpu_custom_call.1} parent=61 // pred_fallthru
            _
          %417 = vnop
        $region62: #{tpu_custom_call.1} parent=19 // pred_fallthru
          _
      $region20: #{tpu_custom_call.1} parent=5 // pred_fallthru
        _
      %p418 = scmp.le.s32.totalorder 1, %s15
      %p419 = scmp.lt.s32.totalorder %s15, 7
      %p420 = pnand %p418, %p419
      %p421 = pneg %p420
      // Predicated region
      $region97: #{tpu_custom_call.1} parent=5 // pred_check
        _
      $region98: #{tpu_custom_call.1} parent=5 // pred_check_branch
        %423 = sbr.rel (%p420) target = $region100
      $region99: #{tpu_custom_call.1} parent=5 // pred_region
        %s424 = ssub.s32 %s15, 1
        %s425 = sand.u32 %s42, 1
        %s426 = sand.u32 %s42, 1
        %s427 = smul.addr %s426, 64
        %s428 = scalar_lea.vmem [#allocation6], %s427
        // Predicated region
        $region101: #{tpu_custom_call.1} parent=99 // pred_check
          %p429 = pneg %p55
        $region102: #{tpu_custom_call.1} parent=99 // pred_check_branch
          %431 = sbr.rel (%p429) target = $region104
        $region103: #{tpu_custom_call.1} parent=99 // pred_region
          _
        $region104: #{tpu_custom_call.1} parent=99 // pred_fallthru
          _
        %s432 = sand.u32 %s70, 1
        %s433 = sand.u32 %s70, 1
        %s434 = smul.addr %s433, 192
        %s435 = scalar_lea.vmem [#allocation7], %s434
        // Predicated region
        $region105: #{tpu_custom_call.1} parent=99 // pred_check
          %p436 = pneg %p83
        $region106: #{tpu_custom_call.1} parent=99 // pred_check_branch
          %438 = sbr.rel (%p436) target = $region108
        $region107: #{tpu_custom_call.1} parent=99 // pred_region
          _
        $region108: #{tpu_custom_call.1} parent=99 // pred_fallthru
          _
        %s439 = sand.u32 %s42, 1
        %s440 = sand.u32 %s42, 1
        %s441 = smul.addr %s440, 64
        %s442 = scalar_lea.vmem [#allocation6], %s441
        %p443 = pneg %p55
        %p444 = pneg %p52
        %s445 = sand.u32 %s70, 1
        %s446 = sand.u32 %s70, 1
        %s447 = smul.addr %s446, 192
        %s448 = scalar_lea.vmem [#allocation7], %s447
        %p449 = pneg %p83
        %p450 = pneg %p80
        %p451 = pneg %p104
        %p452 = pneg %p101
        %p453 = pneg %p132
        %p454 = pneg %p129
        %s455 = sand.u32 %s119, 1
        %s456 = scalar_lea.sflag [#allocation9], %s455
        %s457 = sand.u32 %s119, 1
        %s458 = smul.addr %s457, 64
        %s459 = scalar_lea.vmem [#allocation8], %s458
        %p460 = pneg %p160
        %p461 = pneg %p157
        %s462 = sand.u32 %s147, 1
        %s463 = sand.u32 %s147, 1
        %s464 = smul.addr %s463, 64
        %s465 = scalar_lea.vmem [#allocation10], %s464
        %p466 = pneg %p188
        %p467 = pneg %p185
        %s468 = sand.u32 %s175, 1
        %s469 = sand.u32 %s175, 1
        %s470 = smul.addr %s469, 64
        %s471 = scalar_lea.vmem [#allocation11], %s470
        %s472 = smul.u32 8, %s25
        %s473 = smul.u32 8, %s25
        %s474 = smul.u32 8, %s25
        %s475 = smul.u32 8, %s25
        %s476 = smul.u32 8, %s25
        %p477 = scmp.eq.s32.totalorder %s25, 0
        // Predicated region
        $region109: #{tpu_custom_call.1} parent=99 // pred_check
          %p478 = pneg %p477
        $region110: #{tpu_custom_call.1} parent=99 // pred_check_branch
          %480 = sbr.rel (%p478) target = $region112
        $region111: #{tpu_custom_call.1} parent=99 // pred_region
          %vm481 = vcmask 7168
          %482 = vst.msk [vmem:[#allocation4] sm:$0xff] %vm481, 0.0
          %483 = vst.msk [vmem:[#allocation5] sm:$0xff] %vm481, 0.0
        $region112: #{tpu_custom_call.1} parent=99 // pred_fallthru
          _
        %v484 = vld [vmem:[%s428] sm:$0xff]
        %v485 = vld [vmem:[%s428 + $0x8] sm:$0xff]
        %v486 = vld [vmem:[%s428 + $0x10] sm:$0xff]
        %v487 = vld [vmem:[%s428 + $0x18] sm:$0xff]
        %v488 = vld [vmem:[%s428 + $0x20] sm:$0xff]
        %v489 = vld [vmem:[%s428 + $0x28] sm:$0xff]
        %v490 = vld [vmem:[%s428 + $0x30] sm:$0xff]
        %v491 = vld [vmem:[%s428 + $0x38] sm:$0xff]
        %v492 = vld [vmem:[%s435] sm:$0xff]
        %v493 = vld [vmem:[%s435 + $0x8] sm:$0xff]
        %v494 = vld [vmem:[%s435 + $0x10] sm:$0xff]
        %v495 = vld [vmem:[%s435 + $0x18] sm:$0xff]
        %v496 = vld [vmem:[%s435 + $0x20] sm:$0xff]
        %v497 = vld [vmem:[%s435 + $0x28] sm:$0xff]
        %v498 = vld [vmem:[%s435 + $0x30] sm:$0xff]
        %v499 = vld [vmem:[%s435 + $0x38] sm:$0xff]
        %s500 = scalar_lea.vmem %s435, 64 [#allocation7]
        %v501 = vld [vmem:[%s500] sm:$0xff]
        %v502 = vld [vmem:[%s500 + $0x8] sm:$0xff]
        %v503 = vld [vmem:[%s500 + $0x10] sm:$0xff]
        %v504 = vld [vmem:[%s500 + $0x18] sm:$0xff]
        %v505 = vld [vmem:[%s500 + $0x20] sm:$0xff]
        %v506 = vld [vmem:[%s500 + $0x28] sm:$0xff]
        %v507 = vld [vmem:[%s500 + $0x30] sm:$0xff]
        %v508 = vld [vmem:[%s500 + $0x38] sm:$0xff]
        %s509 = scalar_lea.vmem %s435, 128 [#allocation7]
        %v510 = vld [vmem:[%s509] sm:$0xff]
        %v511 = vld [vmem:[%s509 + $0x8] sm:$0xff]
        %v512 = vld [vmem:[%s509 + $0x10] sm:$0xff]
        %v513 = vld [vmem:[%s509 + $0x18] sm:$0xff]
        %v514 = vld [vmem:[%s509 + $0x20] sm:$0xff]
        %v515 = vld [vmem:[%s509 + $0x28] sm:$0xff]
        %v516 = vld [vmem:[%s509 + $0x30] sm:$0xff]
        %v517 = vld [vmem:[%s509 + $0x38] sm:$0xff]
        %v518 = vld [vmem:[#allocation4] sm:$0xff]
        %v519 = vld [vmem:[#allocation5] sm:$0xff]
        %v520 = vcvt.s32.f32 0
        %v521 = vcvt.s32.f32 1
        %v522 = vcvt.s32.f32 2
        %v523 = vcvt.s32.f32 3
        %v524 = vcvt.s32.f32 4
        %v525 = vcvt.s32.f32 5
        %v526 = vcvt.s32.f32 6
        %v527 = vcvt.s32.f32 7
        %v528 = vadd.f32 %v520, 1.0
        %v529 = vadd.f32 %v521, 1.0
        %v530 = vadd.f32 %v522, 1.0
        %v531 = vadd.f32 %v523, 1.0
        %v532 = vadd.f32 %v524, 1.0
        %v533 = vadd.f32 %v525, 1.0
        %v534 = vadd.f32 %v526, 1.0
        %v535 = vadd.f32 %v527, 1.0
        %v536 = vmul.f32 %v492, 0.9801987
        %v537 = vmul.f32 %v493, 0.9801987
        %v538 = vmul.f32 %v494, 0.9801987
        %v539 = vmul.f32 %v495, 0.9801987
        %v540 = vmul.f32 %v496, 0.9801987
        %v541 = vmul.f32 %v497, 0.9801987
        %v542 = vmul.f32 %v498, 0.9801987
        %v543 = vadd.f32 %v492, 0.0
        %v544 = vadd.f32 %v493, %v536
        %v545 = vadd.f32 %v494, %v537
        %v546 = vadd.f32 %v495, %v538
        %v547 = vadd.f32 %v496, %v539
        %v548 = vadd.f32 %v497, %v540
        %v549 = vadd.f32 %v498, %v541
        %v550 = vadd.f32 %v499, %v542
        %v551 = vmul.f32 %v543, 0.96078944
        %v552 = vmul.f32 %v544, 0.96078944
        %v553 = vmul.f32 %v545, 0.96078944
        %v554 = vmul.f32 %v546, 0.96078944
        %v555 = vmul.f32 %v547, 0.96078944
        %v556 = vmul.f32 %v548, 0.96078944
        %v557 = vadd.f32 %v543, 0.0
        %v558 = vadd.f32 %v544, 0.0
        %v559 = vadd.f32 %v545, %v551
        %v560 = vadd.f32 %v546, %v552
        %v561 = vadd.f32 %v547, %v553
        %v562 = vadd.f32 %v548, %v554
        %v563 = vadd.f32 %v549, %v555
        %v564 = vadd.f32 %v550, %v556
        %v565 = vmul.f32 %v557, 0.9231163
        %v566 = vmul.f32 %v558, 0.9231163
        %v567 = vmul.f32 %v559, 0.9231163
        %v568 = vmul.f32 %v560, 0.9231163
        %v569 = vadd.f32 %v557, 0.0
        %v570 = vadd.f32 %v558, 0.0
        %v571 = vadd.f32 %v559, 0.0
        %v572 = vadd.f32 %v560, 0.0
        %v573 = vadd.f32 %v561, %v565
        %v574 = vadd.f32 %v562, %v566
        %v575 = vadd.f32 %v563, %v567
        %v576 = vadd.f32 %v564, %v568
        %v577 = vmul.f32 %v528, -0.02
        %v578 = vmul.f32 %v529, -0.02
        %v579 = vmul.f32 %v530, -0.02
        %v580 = vmul.f32 %v531, -0.02
        %v581 = vmul.f32 %v532, -0.02
        %v582 = vmul.f32 %v533, -0.02
        %v583 = vmul.f32 %v534, -0.02
        %v584 = vmul.f32 %v535, -0.02
        %v585 = vmul.f32 %v577, 1.442695
        %v586 = vpow.pop %v585
        %v587 = vmul.f32 %v578, 1.442695
        %v588 = vpow.pop %v587
        %v589 = vmul.f32 %v579, 1.442695
        %v590 = vpow.pop %v589
        %v591 = vmul.f32 %v580, 1.442695
        %v592 = vpow.pop %v591
        %v593 = vmul.f32 %v581, 1.442695
        %v594 = vpow.pop %v593
        %v595 = vmul.f32 %v582, 1.442695
        %v596 = vpow.pop %v595
        %v597 = vmul.f32 %v583, 1.442695
        %v598 = vpow.pop %v597
        %v599 = vmul.f32 %v584, 1.442695
        %v600 = vpow.pop %v599
        %v601 = vmul.f32 %v586, %v519
        %v602 = vmul.f32 %v588, %v519
        %v603 = vmul.f32 %v590, %v519
        %v604 = vmul.f32 %v592, %v519
        %v605 = vmul.f32 %v594, %v519
        %v606 = vmul.f32 %v596, %v519
        %v607 = vmul.f32 %v598, %v519
        %v608 = vmul.f32 %v600, %v519
        %v609 = vadd.f32 %v569, %v601
        %v610 = vadd.f32 %v570, %v602
        %v611 = vadd.f32 %v571, %v603
        %v612 = vadd.f32 %v572, %v604
        %v613 = vadd.f32 %v573, %v605
        %v614 = vadd.f32 %v574, %v606
        %v615 = vadd.f32 %v575, %v607
        %v616 = vadd.f32 %v576, %v608
        %vm617 = vcmask 7168
        %618 = vst.msk [vmem:[%s471] sm:$0xff] %vm617, %v609
        %619 = vst.msk [vmem:[%s471 + $0x8] sm:$0xff] %vm617, %v610
        %620 = vst.msk [vmem:[%s471 + $0x10] sm:$0xff] %vm617, %v611
        %621 = vst.msk [vmem:[%s471 + $0x18] sm:$0xff] %vm617, %v612
        %622 = vst.msk [vmem:[%s471 + $0x20] sm:$0xff] %vm617, %v613
        %623 = vst.msk [vmem:[%s471 + $0x28] sm:$0xff] %vm617, %v614
        %624 = vst.msk [vmem:[%s471 + $0x30] sm:$0xff] %vm617, %v615
        %625 = vst.msk [vmem:[%s471 + $0x38] sm:$0xff] %vm617, %v616
        %626 = vst.msk [vmem:[#allocation5] sm:$0xff] %vm617, %v616
        %627 = vmax.xlane.f32.xlu0 %v484
        %v628 = vpop.xlane.xlu0 %627
        %629 = vmax.xlane.f32.xlu0 %v485
        %v630 = vpop.xlane.xlu0 %629
        %631 = vmax.xlane.f32.xlu0 %v486
        %v632 = vpop.xlane.xlu0 %631
        %633 = vmax.xlane.f32.xlu0 %v487
        %v634 = vpop.xlane.xlu0 %633
        %635 = vmax.xlane.f32.xlu0 %v488
        %v636 = vpop.xlane.xlu0 %635
        %637 = vmax.xlane.f32.xlu0 %v489
        %v638 = vpop.xlane.xlu0 %637
        %639 = vmax.xlane.f32.xlu0 %v490
        %v640 = vpop.xlane.xlu0 %639
        %641 = vmax.xlane.f32.xlu0 %v491
        %v642 = vpop.xlane.xlu0 %641
        %v643 = vsub.f32 %v484, %v628
        %v644 = vsub.f32 %v485, %v630
        %v645 = vsub.f32 %v486, %v632
        %v646 = vsub.f32 %v487, %v634
        %v647 = vsub.f32 %v488, %v636
        %v648 = vsub.f32 %v489, %v638
        %v649 = vsub.f32 %v490, %v640
        %v650 = vsub.f32 %v491, %v642
        %v651 = vmul.f32 %v643, 1.442695
        %v652 = vpow.pop %v651
        %v653 = vmul.f32 %v644, 1.442695
        %v654 = vpow.pop %v653
        %v655 = vmul.f32 %v645, 1.442695
        %v656 = vpow.pop %v655
        %v657 = vmul.f32 %v646, 1.442695
        %v658 = vpow.pop %v657
        %v659 = vmul.f32 %v647, 1.442695
        %v660 = vpow.pop %v659
        %v661 = vmul.f32 %v648, 1.442695
        %v662 = vpow.pop %v661
        %v663 = vmul.f32 %v649, 1.442695
        %v664 = vpow.pop %v663
        %v665 = vmul.f32 %v650, 1.442695
        %v666 = vpow.pop %v665
        %v667 = vld [vmem:[%s2] sm:$0xff]
        %v668 = vld [vmem:[%s2 + $0x8] sm:$0xff]
        %v669 = vld [vmem:[%s2 + $0x10] sm:$0xff]
        %v670 = vld [vmem:[%s2 + $0x18] sm:$0xff]
        %v671 = vld [vmem:[%s2 + $0x20] sm:$0xff]
        %v672 = vld [vmem:[%s2 + $0x28] sm:$0xff]
        %v673 = vld [vmem:[%s2 + $0x30] sm:$0xff]
        %v674 = vld [vmem:[%s2 + $0x38] sm:$0xff]
        %v675 = vld [vmem:[%s2 + $0x40] sm:$0xff]
        %v676 = vld [vmem:[%s2 + $0x48] sm:$0xff]
        %v677 = vld [vmem:[%s2 + $0x50] sm:$0xff]
        %v678 = vld [vmem:[%s2 + $0x58] sm:$0xff]
        %v679 = vld [vmem:[%s2 + $0x60] sm:$0xff]
        %v680 = vld [vmem:[%s2 + $0x68] sm:$0xff]
        %v681 = vld [vmem:[%s2 + $0x70] sm:$0xff]
        %v682 = vld [vmem:[%s2 + $0x78] sm:$0xff]
        %683 = vmatprep.subr.mxu0 0.0
        %684 = vmatpush1.msra.mxu0 %v667
        %685 = vmatprep.subr.mxu0 0.0
        %686 = vmatpush1.msra.mxu0 %v668
        %687 = vmatprep.subr.mxu0 0.0
        %688 = vmatpush1.msra.mxu0 %v669
        %689 = vmatprep.subr.mxu0 0.0
        %690 = vmatpush1.msra.mxu0 %v670
        %691 = vmatprep.subr.mxu0 0.0
        %692 = vmatpush1.msra.mxu0 %v671
        %693 = vmatprep.subr.mxu0 0.0
        %694 = vmatpush1.msra.mxu0 %v672
        %695 = vmatprep.subr.mxu0 0.0
        %696 = vmatpush1.msra.mxu0 %v673
        %697 = vmatprep.subr.mxu0 0.0
        %698 = vmatpush1.msra.mxu0 %v674
        %699 = vmatprep.subr.mxu0 0.0
        %700 = vmatpush1.msra.mxu0 %v675
        %701 = vmatprep.subr.mxu0 0.0
        %702 = vmatpush1.msra.mxu0 %v676
        %703 = vmatprep.subr.mxu0 0.0
        %704 = vmatpush1.msra.mxu0 %v677
        %705 = vmatprep.subr.mxu0 0.0
        %706 = vmatpush1.msra.mxu0 %v678
        %707 = vmatprep.subr.mxu0 0.0
        %708 = vmatpush1.msra.mxu0 %v679
        %709 = vmatprep.subr.mxu0 0.0
        %710 = vmatpush1.msra.mxu0 %v680
        %711 = vmatprep.subr.mxu0 0.0
        %712 = vmatpush1.msra.mxu0 %v681
        %713 = vmatprep.subr.mxu0 0.0
        %714 = vmatpush1.msra.mxu0 %v682
        %715 = vmatprep.subr.mxu0 0.0
        %716 = vmatpush1.msra.mxu0 0.0
        %717 = vmatprep.subr.mxu0 0.0
        %718 = vmatpush1.msra.mxu0 0.0
        %719 = vmatprep.subr.mxu0 0.0
        %720 = vmatpush1.msra.mxu0 0.0
        %721 = vmatprep.subr.mxu0 0.0
        %722 = vmatpush1.msra.mxu0 0.0
        %723 = vmatprep.subr.mxu0 0.0
        %724 = vmatpush1.msra.mxu0 0.0
        %725 = vmatprep.subr.mxu0 0.0
        %726 = vmatpush1.msra.mxu0 0.0
        %727 = vmatprep.subr.mxu0 0.0
        %728 = vmatpush1.msra.mxu0 0.0
        %729 = vmatprep.subr.mxu0 0.0
        %730 = vmatpush1.msra.mxu0 0.0
        %731 = vmatprep.subr.mxu0 0.0
        %732 = vmatpush1.msra.mxu0 0.0
        %733 = vmatprep.subr.mxu0 0.0
        %734 = vmatpush1.msra.mxu0 0.0
        %735 = vmatprep.subr.mxu0 0.0
        %736 = vmatpush1.msra.mxu0 0.0
        %737 = vmatprep.subr.mxu0 0.0
        %738 = vmatpush1.msra.mxu0 0.0
        %739 = vmatprep.subr.mxu0 0.0
        %740 = vmatpush1.msra.mxu0 0.0
        %741 = vmatprep.subr.mxu0 0.0
        %742 = vmatpush1.msra.mxu0 0.0
        %743 = vmatprep.subr.mxu0 0.0
        %744 = vmatpush1.msra.mxu0 0.0
        %745 = vmatprep.subr.mxu0 0.0
        %746 = vmatpush1.msra.mxu0 0.0
        %747 = vmatprep.mubr.f32.mxu0 0.0
        %748 = vmatmul.mubr.f32.gmra.mrb[0].mxu0 %v652
        %v749 = vpop.f32.mrb[0].mxu0
        %v750 = vadd.f32 0.0, %v749
        %v751 = vpop.f32.mrb[0].mxu0
        %752 = vmatprep.mubr.f32.mxu0 0.0
        %753 = vmatmul.mubr.f32.gmra.mrb[0].mxu0 %v654
        %v754 = vpop.f32.mrb[0].mxu0
        %v755 = vadd.f32 0.0, %v754
        %v756 = vpop.f32.mrb[0].mxu0
        %757 = vmatprep.mubr.f32.mxu0 0.0
        %758 = vmatmul.mubr.f32.gmra.mrb[0].mxu0 %v656
        %v759 = vpop.f32.mrb[0].mxu0
        %v760 = vadd.f32 0.0, %v759
        %v761 = vpop.f32.mrb[0].mxu0
        %762 = vmatprep.mubr.f32.mxu0 0.0
        %763 = vmatmul.mubr.f32.gmra.mrb[0].mxu0 %v658
        %v764 = vpop.f32.mrb[0].mxu0
        %v765 = vadd.f32 0.0, %v764
        %v766 = vpop.f32.mrb[0].mxu0
        %767 = vmatprep.mubr.f32.mxu0 0.0
        %768 = vmatmul.mubr.f32.gmra.mrb[0].mxu0 %v660
        %v769 = vpop.f32.mrb[0].mxu0
        %v770 = vadd.f32 0.0, %v769
        %v771 = vpop.f32.mrb[0].mxu0
        %772 = vmatprep.mubr.f32.mxu0 0.0
        %773 = vmatmul.mubr.f32.gmra.mrb[0].mxu0 %v662
        %v774 = vpop.f32.mrb[0].mxu0
        %v775 = vadd.f32 0.0, %v774
        %v776 = vpop.f32.mrb[0].mxu0
        %777 = vmatprep.mubr.f32.mxu0 0.0
        %778 = vmatmul.mubr.f32.gmra.mrb[0].mxu0 %v664
        %v779 = vpop.f32.mrb[0].mxu0
        %v780 = vadd.f32 0.0, %v779
        %v781 = vpop.f32.mrb[0].mxu0
        %782 = vmatprep.mubr.f32.mxu0 0.0
        %783 = vmatmul.mubr.f32.gmra.mrb[0].mxu0 %v666
        %v784 = vpop.f32.mrb[0].mxu0
        %v785 = vadd.f32 0.0, %v784
        %v786 = vpop.f32.mrb[0].mxu0
        %787 = vdwg.mxu0
        %v788 = vlog2.pop %v750
        %v789 = vmul.f32 %v788, 0.6931472
        %v790 = vlog2.pop %v755
        %v791 = vmul.f32 %v790, 0.6931472
        %v792 = vlog2.pop %v760
        %v793 = vmul.f32 %v792, 0.6931472
        %v794 = vlog2.pop %v765
        %v795 = vmul.f32 %v794, 0.6931472
        %v796 = vlog2.pop %v770
        %v797 = vmul.f32 %v796, 0.6931472
        %v798 = vlog2.pop %v775
        %v799 = vmul.f32 %v798, 0.6931472
        %v800 = vlog2.pop %v780
        %v801 = vmul.f32 %v800, 0.6931472
        %v802 = vlog2.pop %v785
        %v803 = vmul.f32 %v802, 0.6931472
        %v804 = vadd.f32 %v628, %v789
        %v805 = vadd.f32 %v630, %v791
        %v806 = vadd.f32 %v632, %v793
        %v807 = vadd.f32 %v634, %v795
        %v808 = vadd.f32 %v636, %v797
        %v809 = vadd.f32 %v638, %v799
        %v810 = vadd.f32 %v640, %v801
        %v811 = vadd.f32 %v642, %v803
        %v812 = vlaneseq
        %v813 = vand.u32 %v812, 127
        %v814 = vcvt.s32.f32 %v813
        %823 = vrot.lane.b32.xlu0 %v750, 1
        %v824 = vpop.permute.xlu0 %823
        %825 = vrot.lane.b32.xlu0 %v755, 1
        %v826 = vpop.permute.xlu0 %825
        %827 = vrot.lane.b32.xlu0 %v760, 1
        %v828 = vpop.permute.xlu0 %827
        %829 = vrot.lane.b32.xlu0 %v765, 1
        %v830 = vpop.permute.xlu0 %829
        %831 = vrot.lane.b32.xlu0 %v770, 1
        %v832 = vpop.permute.xlu0 %831
        %833 = vrot.lane.b32.xlu0 %v775, 1
        %v834 = vpop.permute.xlu0 %833
        %835 = vrot.lane.b32.xlu0 %v780, 1
        %v836 = vpop.permute.xlu0 %835
        %837 = vrot.lane.b32.xlu0 %v785, 1
        %v838 = vpop.permute.xlu0 %837
        %v847 = vmul.f32 %v501, %v824
        %v848 = vmul.f32 %v502, %v826
        %v849 = vmul.f32 %v503, %v828
        %v850 = vmul.f32 %v504, %v830
        %v851 = vmul.f32 %v505, %v832
        %v852 = vmul.f32 %v506, %v834
        %v853 = vmul.f32 %v507, %v836
        %v854 = vmul.f32 %v508, %v838
        %856 = vset.pattern.permute.xlu0 0
        %857 = vperm.xlu0 %856, %v847
        %v858 = vpop.permute.xlu0 %857
        %861 = vset.pattern.permute.xlu0 0
        %862 = vperm.xlu0 %861, %v848
        %v863 = vpop.permute.xlu0 %862
        %866 = vset.pattern.permute.xlu0 0
        %867 = vperm.xlu0 %866, %v849
        %v868 = vpop.permute.xlu0 %867
        %871 = vset.pattern.permute.xlu0 0
        %872 = vperm.xlu0 %871, %v850
        %v873 = vpop.permute.xlu0 %872
        %876 = vset.pattern.permute.xlu0 0
        %877 = vperm.xlu0 %876, %v851
        %v878 = vpop.permute.xlu0 %877
        %881 = vset.pattern.permute.xlu0 0
        %882 = vperm.xlu0 %881, %v852
        %v883 = vpop.permute.xlu0 %882
        %886 = vset.pattern.permute.xlu0 0
        %887 = vperm.xlu0 %886, %v853
        %v888 = vpop.permute.xlu0 %887
        %891 = vset.pattern.permute.xlu0 0
        %892 = vperm.xlu0 %891, %v854
        %v893 = vpop.permute.xlu0 %892
        %vm895 = vcmp.ge.f32.partialorder %v750, %v858
        %vm896 = vcmp.ge.f32.partialorder %v755, %v863
        %vm897 = vcmp.ge.f32.partialorder %v760, %v868
        %vm898 = vcmp.ge.f32.partialorder %v765, %v873
        %vm899 = vcmp.ge.f32.partialorder %v770, %v878
        %vm900 = vcmp.ge.f32.partialorder %v775, %v883
        %vm901 = vcmp.ge.f32.partialorder %v780, %v888
        %vm902 = vcmp.ge.f32.partialorder %v785, %v893
        %v903 = vsel %vm895, %v814, 128.0
        %v904 = vsel %vm896, %v814, 128.0
        %v905 = vsel %vm897, %v814, 128.0
        %v906 = vsel %vm898, %v814, 128.0
        %v907 = vsel %vm899, %v814, 128.0
        %v908 = vsel %vm900, %v814, 128.0
        %v909 = vsel %vm901, %v814, 128.0
        %v910 = vsel %vm902, %v814, 128.0
        %911 = vmin.xlane.f32.xlu0 %v903
        %v912 = vpop.xlane.xlu0 %911
        %913 = vmin.xlane.f32.xlu0 %v904
        %v914 = vpop.xlane.xlu0 %913
        %915 = vmin.xlane.f32.xlu0 %v905
        %v916 = vpop.xlane.xlu0 %915
        %917 = vmin.xlane.f32.xlu0 %v906
        %v918 = vpop.xlane.xlu0 %917
        %919 = vmin.xlane.f32.xlu0 %v907
        %v920 = vpop.xlane.xlu0 %919
        %921 = vmin.xlane.f32.xlu0 %v908
        %v922 = vpop.xlane.xlu0 %921
        %923 = vmin.xlane.f32.xlu0 %v909
        %v924 = vpop.xlane.xlu0 %923
        %925 = vmin.xlane.f32.xlu0 %v910
        %v926 = vpop.xlane.xlu0 %925
        %vm927 = vcmp.eq.f32.partialorder %v814, %v912
        %vm928 = vcmp.eq.f32.partialorder %v814, %v914
        %vm929 = vcmp.eq.f32.partialorder %v814, %v916
        %vm930 = vcmp.eq.f32.partialorder %v814, %v918
        %vm931 = vcmp.eq.f32.partialorder %v814, %v920
        %vm932 = vcmp.eq.f32.partialorder %v814, %v922
        %vm933 = vcmp.eq.f32.partialorder %v814, %v924
        %vm934 = vcmp.eq.f32.partialorder %v814, %v926
        %v935 = vsel %vm927, 1, 0
        %v936 = vsel %vm928, 1, 0
        %v937 = vsel %vm929, 1, 0
        %v938 = vsel %vm930, 1, 0
        %v939 = vsel %vm931, 1, 0
        %v940 = vsel %vm932, 1, 0
        %v941 = vsel %vm933, 1, 0
        %v942 = vsel %vm934, 1, 0
        %v943 = vcvt.s32.f32 %v935
        %v944 = vcvt.s32.f32 %v936
        %v945 = vcvt.s32.f32 %v937
        %v946 = vcvt.s32.f32 %v938
        %v947 = vcvt.s32.f32 %v939
        %v948 = vcvt.s32.f32 %v940
        %v949 = vcvt.s32.f32 %v941
        %v950 = vcvt.s32.f32 %v942
        %951 = vst [vmem:[%s459] sm:$0xff] %v943
        %952 = vst [vmem:[%s459 + $0x8] sm:$0xff] %v944
        %953 = vst [vmem:[%s459 + $0x10] sm:$0xff] %v945
        %954 = vst [vmem:[%s459 + $0x18] sm:$0xff] %v946
        %955 = vst [vmem:[%s459 + $0x20] sm:$0xff] %v947
        %956 = vst [vmem:[%s459 + $0x28] sm:$0xff] %v948
        %957 = vst [vmem:[%s459 + $0x30] sm:$0xff] %v949
        %958 = vst [vmem:[%s459 + $0x38] sm:$0xff] %v950
        %v959 = vadd.f32 %v804, -6.9077554
        %v960 = vadd.f32 %v805, -6.9077554
        %v961 = vadd.f32 %v806, -6.9077554
        %v962 = vadd.f32 %v807, -6.9077554
        %v963 = vadd.f32 %v808, -6.9077554
        %v964 = vadd.f32 %v809, -6.9077554
        %v965 = vadd.f32 %v810, -6.9077554
        %v966 = vadd.f32 %v811, -6.9077554
        %975 = vrot.lane.b32.xlu0 %v510, 127
        %v976 = vpop.permute.xlu0 %975
        %977 = vrot.lane.b32.xlu0 %v511, 127
        %v978 = vpop.permute.xlu0 %977
        %979 = vrot.lane.b32.xlu0 %v512, 127
        %v980 = vpop.permute.xlu0 %979
        %981 = vrot.lane.b32.xlu0 %v513, 127
        %v982 = vpop.permute.xlu0 %981
        %983 = vrot.lane.b32.xlu0 %v514, 127
        %v984 = vpop.permute.xlu0 %983
        %985 = vrot.lane.b32.xlu0 %v515, 127
        %v986 = vpop.permute.xlu0 %985
        %987 = vrot.lane.b32.xlu0 %v516, 127
        %v988 = vpop.permute.xlu0 %987
        %989 = vrot.lane.b32.xlu0 %v517, 127
        %v990 = vpop.permute.xlu0 %989
        %v999 = vadd.f32 %v959, %v976
        %v1000 = vadd.f32 %v960, %v978
        %v1001 = vadd.f32 %v961, %v980
        %v1002 = vadd.f32 %v962, %v982
        %v1003 = vadd.f32 %v963, %v984
        %v1004 = vadd.f32 %v964, %v986
        %v1005 = vadd.f32 %v965, %v988
        %v1006 = vadd.f32 %v966, %v990
        %1015 = vrot.lane.b32.xlu0 %v609, 127
        %v1016 = vpop.permute.xlu0 %1015
        %1017 = vrot.lane.b32.xlu0 %v610, 127
        %v1018 = vpop.permute.xlu0 %1017
        %1019 = vrot.lane.b32.xlu0 %v611, 127
        %v1020 = vpop.permute.xlu0 %1019
        %1021 = vrot.lane.b32.xlu0 %v612, 127
        %v1022 = vpop.permute.xlu0 %1021
        %1023 = vrot.lane.b32.xlu0 %v613, 127
        %v1024 = vpop.permute.xlu0 %1023
        %1025 = vrot.lane.b32.xlu0 %v614, 127
        %v1026 = vpop.permute.xlu0 %1025
        %1027 = vrot.lane.b32.xlu0 %v615, 127
        %v1028 = vpop.permute.xlu0 %1027
        %1029 = vrot.lane.b32.xlu0 %v616, 127
        %v1030 = vpop.permute.xlu0 %1029
        %v1039 = vadd.f32 %v999, %v1016
        %v1040 = vadd.f32 %v1000, %v1018
        %v1041 = vadd.f32 %v1001, %v1020
        %v1042 = vadd.f32 %v1002, %v1022
        %v1043 = vadd.f32 %v1003, %v1024
        %v1044 = vadd.f32 %v1004, %v1026
        %v1045 = vadd.f32 %v1005, %v1028
        %v1046 = vadd.f32 %v1006, %v1030
        %1055 = vrot.lane.b32.xlu0 %v1039, 1
        %v1056 = vpop.permute.xlu0 %1055
        %1057 = vrot.lane.b32.xlu0 %v1040, 1
        %v1058 = vpop.permute.xlu0 %1057
        %1059 = vrot.lane.b32.xlu0 %v1041, 1
        %v1060 = vpop.permute.xlu0 %1059
        %1061 = vrot.lane.b32.xlu0 %v1042, 1
        %v1062 = vpop.permute.xlu0 %1061
        %1063 = vrot.lane.b32.xlu0 %v1043, 1
        %v1064 = vpop.permute.xlu0 %1063
        %1065 = vrot.lane.b32.xlu0 %v1044, 1
        %v1066 = vpop.permute.xlu0 %1065
        %1067 = vrot.lane.b32.xlu0 %v1045, 1
        %v1068 = vpop.permute.xlu0 %1067
        %1069 = vrot.lane.b32.xlu0 %v1046, 1
        %v1070 = vpop.permute.xlu0 %1069
        %1079 = vst.msk [vmem:[#allocation2] sm:$0xff] %vm617, %v1056
        %1080 = vst.msk [vmem:[#allocation2 + $0x8] sm:$0xff] %vm617, %v1058
        %1081 = vst.msk [vmem:[#allocation2 + $0x10] sm:$0xff] %vm617, %v1060
        %1082 = vst.msk [vmem:[#allocation2 + $0x18] sm:$0xff] %vm617, %v1062
        %1083 = vst.msk [vmem:[#allocation2 + $0x20] sm:$0xff] %vm617, %v1064
        %1084 = vst.msk [vmem:[#allocation2 + $0x28] sm:$0xff] %vm617, %v1066
        %1085 = vst.msk [vmem:[#allocation2 + $0x30] sm:$0xff] %vm617, %v1068
        %1086 = vst.msk [vmem:[#allocation2 + $0x38] sm:$0xff] %vm617, %v1070
        %v1087 = vld [vmem:[#allocation2] sm:$0xff]
        %vm1088 = vcmp.lt.f32.partialorder %v518, %v1087
        %v1089 = vsel %vm1088, 1, 0
        %v1090 = vcvt.s32.f32 %v1089
        %1091 = vst.msk [vmem:[#allocation3] sm:$0xff] %vm617, %v1090
        %v1092 = vmul.f32 %v518, 0.8187308
        %v1093 = vadd.f32 %v1092, 0.0
        %v1094 = vmul.f32 %v1090, 5.0
        %v1095 = vadd.f32 %v1093, %v1094
        %s1096 = scalar_lea.vmem [#allocation2], 8
        %v1097 = vld [vmem:[%s1096] sm:$0xff]
        %vm1098 = vcmp.lt.f32.partialorder %v1095, %v1097
        %v1099 = vsel %vm1098, 1, 0
        %v1100 = vcvt.s32.f32 %v1099
        %s1101 = scalar_lea.vmem [#allocation3], 8
        %1102 = vst.msk [vmem:[%s1101] sm:$0xff] %vm617, %v1100
        %v1103 = vmul.f32 %v1095, 0.8187308
        %v1104 = vadd.f32 %v1103, 0.0
        %v1105 = vmul.f32 %v1100, 5.0
        %v1106 = vadd.f32 %v1104, %v1105
        %s1107 = scalar_lea.vmem [#allocation2], 16
        %v1108 = vld [vmem:[%s1107] sm:$0xff]
        %vm1109 = vcmp.lt.f32.partialorder %v1106, %v1108
        %v1110 = vsel %vm1109, 1, 0
        %v1111 = vcvt.s32.f32 %v1110
        %s1112 = scalar_lea.vmem [#allocation3], 16
        %1113 = vst.msk [vmem:[%s1112] sm:$0xff] %vm617, %v1111
        %v1114 = vmul.f32 %v1106, 0.8187308
        %v1115 = vadd.f32 %v1114, 0.0
        %v1116 = vmul.f32 %v1111, 5.0
        %v1117 = vadd.f32 %v1115, %v1116
        %s1118 = scalar_lea.vmem [#allocation2], 24
        %v1119 = vld [vmem:[%s1118] sm:$0xff]
        %vm1120 = vcmp.lt.f32.partialorder %v1117, %v1119
        %v1121 = vsel %vm1120, 1, 0
        %v1122 = vcvt.s32.f32 %v1121
        %s1123 = scalar_lea.vmem [#allocation3], 24
        %1124 = vst.msk [vmem:[%s1123] sm:$0xff] %vm617, %v1122
        %v1125 = vmul.f32 %v1117, 0.8187308
        %v1126 = vadd.f32 %v1125, 0.0
        %v1127 = vmul.f32 %v1122, 5.0
        %v1128 = vadd.f32 %v1126, %v1127
        %s1129 = scalar_lea.vmem [#allocation2], 32
        %v1130 = vld [vmem:[%s1129] sm:$0xff]
        %vm1131 = vcmp.lt.f32.partialorder %v1128, %v1130
        %v1132 = vsel %vm1131, 1, 0
        %v1133 = vcvt.s32.f32 %v1132
        %s1134 = scalar_lea.vmem [#allocation3], 32
        %1135 = vst.msk [vmem:[%s1134] sm:$0xff] %vm617, %v1133
        %v1136 = vmul.f32 %v1128, 0.8187308
        %v1137 = vadd.f32 %v1136, 0.0
        %v1138 = vmul.f32 %v1133, 5.0
        %v1139 = vadd.f32 %v1137, %v1138
        %s1140 = scalar_lea.vmem [#allocation2], 40
        %v1141 = vld [vmem:[%s1140] sm:$0xff]
        %vm1142 = vcmp.lt.f32.partialorder %v1139, %v1141
        %v1143 = vsel %vm1142, 1, 0
        %v1144 = vcvt.s32.f32 %v1143
        %s1145 = scalar_lea.vmem [#allocation3], 40
        %1146 = vst.msk [vmem:[%s1145] sm:$0xff] %vm617, %v1144
        %v1147 = vmul.f32 %v1139, 0.8187308
        %v1148 = vadd.f32 %v1147, 0.0
        %v1149 = vmul.f32 %v1144, 5.0
        %v1150 = vadd.f32 %v1148, %v1149
        %s1151 = scalar_lea.vmem [#allocation2], 48
        %v1152 = vld [vmem:[%s1151] sm:$0xff]
        %vm1153 = vcmp.lt.f32.partialorder %v1150, %v1152
        %v1154 = vsel %vm1153, 1, 0
        %v1155 = vcvt.s32.f32 %v1154
        %s1156 = scalar_lea.vmem [#allocation3], 48
        %1157 = vst.msk [vmem:[%s1156] sm:$0xff] %vm617, %v1155
        %v1158 = vmul.f32 %v1150, 0.8187308
        %v1159 = vadd.f32 %v1158, 0.0
        %v1160 = vmul.f32 %v1155, 5.0
        %v1161 = vadd.f32 %v1159, %v1160
        %s1162 = scalar_lea.vmem [#allocation2], 56
        %v1163 = vld [vmem:[%s1162] sm:$0xff]
        %vm1164 = vcmp.lt.f32.partialorder %v1161, %v1163
        %v1165 = vsel %vm1164, 1, 0
        %v1166 = vcvt.s32.f32 %v1165
        %s1167 = scalar_lea.vmem [#allocation3], 56
        %1168 = vst.msk [vmem:[%s1167] sm:$0xff] %vm617, %v1166
        %v1169 = vmul.f32 %v1161, 0.8187308
        %v1170 = vadd.f32 %v1169, 0.0
        %v1171 = vmul.f32 %v1166, 5.0
        %v1172 = vadd.f32 %v1170, %v1171
        %1173 = vst.msk [vmem:[#allocation4] sm:$0xff] %vm617, %v1172
        %v1174 = vld [vmem:[#allocation3] sm:$0xff]
        %v1175 = vld [vmem:[#allocation3 + $0x8] sm:$0xff]
        %v1176 = vld [vmem:[#allocation3 + $0x10] sm:$0xff]
        %v1177 = vld [vmem:[#allocation3 + $0x18] sm:$0xff]
        %v1178 = vld [vmem:[#allocation3 + $0x20] sm:$0xff]
        %v1179 = vld [vmem:[#allocation3 + $0x28] sm:$0xff]
        %v1180 = vld [vmem:[#allocation3 + $0x30] sm:$0xff]
        %v1181 = vld [vmem:[#allocation3 + $0x38] sm:$0xff]
        %v1182 = vmul.f32 %v528, -0.2
        %v1183 = vmul.f32 %v529, -0.2
        %v1184 = vmul.f32 %v530, -0.2
        %v1185 = vmul.f32 %v531, -0.2
        %v1186 = vmul.f32 %v532, -0.2
        %v1187 = vmul.f32 %v533, -0.2
        %v1188 = vmul.f32 %v534, -0.2
        %v1189 = vmul.f32 %v535, -0.2
        %v1190 = vmul.f32 %v1182, 1.442695
        %v1191 = vpow.pop %v1190
        %v1192 = vmul.f32 %v1183, 1.442695
        %v1193 = vpow.pop %v1192
        %v1194 = vmul.f32 %v1184, 1.442695
        %v1195 = vpow.pop %v1194
        %v1196 = vmul.f32 %v1185, 1.442695
        %v1197 = vpow.pop %v1196
        %v1198 = vmul.f32 %v1186, 1.442695
        %v1199 = vpow.pop %v1198
        %v1200 = vmul.f32 %v1187, 1.442695
        %v1201 = vpow.pop %v1200
        %v1202 = vmul.f32 %v1188, 1.442695
        %v1203 = vpow.pop %v1202
        %v1204 = vmul.f32 %v1189, 1.442695
        %v1205 = vpow.pop %v1204
        %v1206 = vmul.f32 %v1191, %v518
        %v1207 = vmul.f32 %v1193, %v518
        %v1208 = vmul.f32 %v1195, %v518
        %v1209 = vmul.f32 %v1197, %v518
        %v1210 = vmul.f32 %v1199, %v518
        %v1211 = vmul.f32 %v1201, %v518
        %v1212 = vmul.f32 %v1203, %v518
        %v1213 = vmul.f32 %v1205, %v518
        %v1214 = vadd.f32 %v1206, 0.0
        %v1215 = vadd.f32 %v1207, 0.0
        %v1216 = vadd.f32 %v1208, 0.0
        %v1217 = vadd.f32 %v1209, 0.0
        %v1218 = vadd.f32 %v1210, 0.0
        %v1219 = vadd.f32 %v1211, 0.0
        %v1220 = vadd.f32 %v1212, 0.0
        %v1221 = vadd.f32 %v1213, 0.0
        %v1222 = vmul.f32 %v1174, 0.8187308
        %v1223 = vmul.f32 %v1175, 0.8187308
        %v1224 = vmul.f32 %v1176, 0.8187308
        %v1225 = vmul.f32 %v1177, 0.8187308
        %v1226 = vmul.f32 %v1178, 0.8187308
        %v1227 = vmul.f32 %v1179, 0.8187308
        %v1228 = vmul.f32 %v1180, 0.8187308
        %v1229 = vadd.f32 %v1174, 0.0
        %v1230 = vadd.f32 %v1175, %v1222
        %v1231 = vadd.f32 %v1176, %v1223
        %v1232 = vadd.f32 %v1177, %v1224
        %v1233 = vadd.f32 %v1178, %v1225
        %v1234 = vadd.f32 %v1179, %v1226
        %v1235 = vadd.f32 %v1180, %v1227
        %v1236 = vadd.f32 %v1181, %v1228
        %v1237 = vmul.f32 %v1229, 0.67032003
        %v1238 = vmul.f32 %v1230, 0.67032003
        %v1239 = vmul.f32 %v1231, 0.67032003
        %v1240 = vmul.f32 %v1232, 0.67032003
        %v1241 = vmul.f32 %v1233, 0.67032003
        %v1242 = vmul.f32 %v1234, 0.67032003
        %v1243 = vadd.f32 %v1229, 0.0
        %v1244 = vadd.f32 %v1230, 0.0
        %v1245 = vadd.f32 %v1231, %v1237
        %v1246 = vadd.f32 %v1232, %v1238
        %v1247 = vadd.f32 %v1233, %v1239
        %v1248 = vadd.f32 %v1234, %v1240
        %v1249 = vadd.f32 %v1235, %v1241
        %v1250 = vadd.f32 %v1236, %v1242
        %v1251 = vmul.f32 %v1243, 0.44932896
        %v1252 = vmul.f32 %v1244, 0.44932896
        %v1253 = vmul.f32 %v1245, 0.44932896
        %v1254 = vmul.f32 %v1246, 0.44932896
        %v1255 = vadd.f32 %v1243, 0.0
        %v1256 = vadd.f32 %v1244, 0.0
        %v1257 = vadd.f32 %v1245, 0.0
        %v1258 = vadd.f32 %v1246, 0.0
        %v1259 = vadd.f32 %v1247, %v1251
        %v1260 = vadd.f32 %v1248, %v1252
        %v1261 = vadd.f32 %v1249, %v1253
        %v1262 = vadd.f32 %v1250, %v1254
        %v1263 = vmul.f32 %v1255, 5.0
        %v1264 = vmul.f32 %v1256, 5.0
        %v1265 = vmul.f32 %v1257, 5.0
        %v1266 = vmul.f32 %v1258, 5.0
        %v1267 = vmul.f32 %v1259, 5.0
        %v1268 = vmul.f32 %v1260, 5.0
        %v1269 = vmul.f32 %v1261, 5.0
        %v1270 = vmul.f32 %v1262, 5.0
        %v1271 = vadd.f32 %v1214, %v1263
        %v1272 = vadd.f32 %v1215, %v1264
        %v1273 = vadd.f32 %v1216, %v1265
        %v1274 = vadd.f32 %v1217, %v1266
        %v1275 = vadd.f32 %v1218, %v1267
        %v1276 = vadd.f32 %v1219, %v1268
        %v1277 = vadd.f32 %v1220, %v1269
        %v1278 = vadd.f32 %v1221, %v1270
        %1279 = vst.msk [vmem:[%s465] sm:$0xff] %vm617, %v1271
        %1280 = vst.msk [vmem:[%s465 + $0x8] sm:$0xff] %vm617, %v1272
        %1281 = vst.msk [vmem:[%s465 + $0x10] sm:$0xff] %vm617, %v1273
        %1282 = vst.msk [vmem:[%s465 + $0x18] sm:$0xff] %vm617, %v1274
        %1283 = vst.msk [vmem:[%s465 + $0x20] sm:$0xff] %vm617, %v1275
        %1284 = vst.msk [vmem:[%s465 + $0x28] sm:$0xff] %vm617, %v1276
        %1285 = vst.msk [vmem:[%s465 + $0x30] sm:$0xff] %vm617, %v1277
        %1286 = vst.msk [vmem:[%s465 + $0x38] sm:$0xff] %vm617, %v1278
        %v1287 = vld [vmem:[%s459] sm:$0xff]
        %v1288 = vld [vmem:[%s459 + $0x8] sm:$0xff]
        %v1289 = vld [vmem:[%s459 + $0x10] sm:$0xff]
        %v1290 = vld [vmem:[%s459 + $0x18] sm:$0xff]
        %v1291 = vld [vmem:[%s459 + $0x20] sm:$0xff]
        %v1292 = vld [vmem:[%s459 + $0x28] sm:$0xff]
        %v1293 = vld [vmem:[%s459 + $0x30] sm:$0xff]
        %v1294 = vld [vmem:[%s459 + $0x38] sm:$0xff]
        %1296 = vset.pattern.permute.xlu0 0
        %1297 = vperm.xlu0 %1296, %v1174
        %v1298 = vpop.permute.xlu0 %1297
        %1301 = vset.pattern.permute.xlu0 0
        %1302 = vperm.xlu0 %1301, %v1175
        %v1303 = vpop.permute.xlu0 %1302
        %1306 = vset.pattern.permute.xlu0 0
        %1307 = vperm.xlu0 %1306, %v1176
        %v1308 = vpop.permute.xlu0 %1307
        %1311 = vset.pattern.permute.xlu0 0
        %1312 = vperm.xlu0 %1311, %v1177
        %v1313 = vpop.permute.xlu0 %1312
        %1316 = vset.pattern.permute.xlu0 0
        %1317 = vperm.xlu0 %1316, %v1178
        %v1318 = vpop.permute.xlu0 %1317
        %1321 = vset.pattern.permute.xlu0 0
        %1322 = vperm.xlu0 %1321, %v1179
        %v1323 = vpop.permute.xlu0 %1322
        %1326 = vset.pattern.permute.xlu0 0
        %1327 = vperm.xlu0 %1326, %v1180
        %v1328 = vpop.permute.xlu0 %1327
        %1331 = vset.pattern.permute.xlu0 0
        %1332 = vperm.xlu0 %1331, %v1181
        %v1333 = vpop.permute.xlu0 %1332
        %v1335 = vmul.f32 %v1287, %v1298
        %v1336 = vmul.f32 %v1288, %v1303
        %v1337 = vmul.f32 %v1289, %v1308
        %v1338 = vmul.f32 %v1290, %v1313
        %v1339 = vmul.f32 %v1291, %v1318
        %v1340 = vmul.f32 %v1292, %v1323
        %v1341 = vmul.f32 %v1293, %v1328
        %v1342 = vmul.f32 %v1294, %v1333
        %1343 = vst [vmem:[%s459] sm:$0xff] %v1335
        %1344 = vst [vmem:[%s459 + $0x8] sm:$0xff] %v1336
        %1345 = vst [vmem:[%s459 + $0x10] sm:$0xff] %v1337
        %1346 = vst [vmem:[%s459 + $0x18] sm:$0xff] %v1338
        %1347 = vst [vmem:[%s459 + $0x20] sm:$0xff] %v1339
        %1348 = vst [vmem:[%s459 + $0x28] sm:$0xff] %v1340
        %1349 = vst [vmem:[%s459 + $0x30] sm:$0xff] %v1341
        %1350 = vst [vmem:[%s459 + $0x38] sm:$0xff] %v1342
        %s1351 = sand.u32 %s119, 1
        %s1352 = scalar_lea.sflag [#allocation9], %s1351
        %s1353 = sand.u32 %s119, 1
        %s1354 = smul.addr %s1353, 64
        %s1355 = scalar_lea.vmem [#allocation8], %s1354
        %s1356 = sand.u32 %s147, 1
        %s1357 = sand.u32 %s147, 1
        %s1358 = smul.addr %s1357, 64
        %s1359 = scalar_lea.vmem [#allocation10], %s1358
        %s1360 = sand.u32 %s175, 1
        %s1361 = sand.u32 %s175, 1
        %s1362 = smul.addr %s1361, 64
        %s1363 = scalar_lea.vmem [#allocation11], %s1362
        // Predicated region
        $region113: #{tpu_custom_call.1} parent=99 // pred_check
          %p1364 = pneg %p129
        $region114: #{tpu_custom_call.1} parent=99 // pred_check_branch
          %1366 = sbr.rel (%p1364) target = $region116
        $region115: #{tpu_custom_call.1} parent=99 // pred_region
          %s1367 = smul.u32 8, %s25
          %s1369 = ssub.s32 1024, 1024
          %1370 = vsyncadd %s1352, %s1369
          %s1371 = smul.addr %s1367, 2
          %s1372 = sadd.s32 %s24, %s1371
          %s1373 = smul.addr %s1372, 128
          %s1374 = scalar_lea.hbm %s3, %s1373
          %s1375 = sshll.u32 %s1355, 4
          %s1376 = int_to_ptr.vmem [resolvable:$true] %s1375
          %1381 = dma.vmem_to_hbm [thread:$0]  %s1376, 1024, %s1374, %s1352, 128, 256, 8
        $region116: #{tpu_custom_call.1} parent=99 // pred_fallthru
          _
        // Predicated region
        $region117: #{tpu_custom_call.1} parent=99 // pred_check
          %p1382 = pneg %p157
        $region118: #{tpu_custom_call.1} parent=99 // pred_check_branch
          %1384 = sbr.rel (%p1382) target = $region120
        $region119: #{tpu_custom_call.1} parent=99 // pred_region
          %s1385 = smul.u32 8, %s25
          %s1386 = smul.addr %s1385, 2
          %s1387 = sadd.s32 %s24, %s1386
          %s1388 = smul.addr %s1387, 8
          %s1389 = scalar_lea.vmem %s4, %s1388
          // Predicated region
          $region121: #{tpu_custom_call.1} parent=119 // pred_check
            _
          $region122: #{tpu_custom_call.1} parent=119 // pred_check_branch
            %1391 = sbr.rel (0) target = $region124
          $region123: #{tpu_custom_call.1} parent=119 // pred_region
            // Predicated region
            $region125: #{tpu_custom_call.1} parent=123 // pred_check
              _
            $region126: #{tpu_custom_call.1} parent=123 // pred_check_branch
              %1393 = sbr.rel (0) target = $region128
            $region127: #{tpu_custom_call.1} parent=123 // pred_region
              // Predicated region
              $region140: #{tpu_custom_call.1} parent=127 // pred_check
                _
              $region141: #{tpu_custom_call.1} parent=127 // pred_check_branch
                %1422 = sbr.rel (0) target = $region143
              $region142: #{tpu_custom_call.1} parent=127 // pred_region
                loop: start=0, step=1, limit=1
                $region144: #{tpu_custom_call.1} parent=142 // loop_pre_header
                  _
                $region145: #{tpu_custom_call.1} parent=142 // loop_header
                  %s1424 = sphi 0, %s1428
                  %p1425 = scmp.ge.s32.totalorder %s1424, 1
                  %s1429 = sphi %s1359, %s1359
                  %s1430 = sphi %s1389, %s1389
                $region146: #{tpu_custom_call.1} parent=142 // loop_header_branch
                  %1427 = sbr.rel (%p1425) target = $region150
                $region147: #{tpu_custom_call.1} parent=142 // loop_body
                  %v1431 = vld [vmem:[%s1429] sm:$0xff]
                  %1432 = vst [vmem:[%s1430] sm:$0xff] %v1431
                  %v1433 = vld [vmem:[%s1429 + $0x8] sm:$0xff]
                  %1434 = vst [vmem:[%s1430 + $0x10] sm:$0xff] %v1433
                  %v1435 = vld [vmem:[%s1429 + $0x10] sm:$0xff]
                  %1436 = vst [vmem:[%s1430 + $0x20] sm:$0xff] %v1435
                  %v1437 = vld [vmem:[%s1429 + $0x18] sm:$0xff]
                  %1438 = vst [vmem:[%s1430 + $0x30] sm:$0xff] %v1437
                  %v1439 = vld [vmem:[%s1429 + $0x20] sm:$0xff]
                  %1440 = vst [vmem:[%s1430 + $0x40] sm:$0xff] %v1439
                  %v1441 = vld [vmem:[%s1429 + $0x28] sm:$0xff]
                  %1442 = vst [vmem:[%s1430 + $0x50] sm:$0xff] %v1441
                  %v1443 = vld [vmem:[%s1429 + $0x30] sm:$0xff]
                  %1444 = vst [vmem:[%s1430 + $0x60] sm:$0xff] %v1443
                  %v1445 = vld [vmem:[%s1429 + $0x38] sm:$0xff]
                  %1446 = vst [vmem:[%s1430 + $0x70] sm:$0xff] %v1445
                $region148: #{tpu_custom_call.1} parent=142 // loop_footer
                  %s1428 = sadd.s32 1, %s1424
                $region149: #{tpu_custom_call.1} parent=142 // loop_footer_branch
                  %1423 = sbr.rel target = $region145
                $region150: #{tpu_custom_call.1} parent=142 // loop_exit
                  _
              $region143: #{tpu_custom_call.1} parent=127 // pred_fallthru
                _
              // Predicated region
              $region151: #{tpu_custom_call.1} parent=127 // pred_check
                _
              $region152: #{tpu_custom_call.1} parent=127 // pred_check_branch
                %1448 = sbr.rel target = $region154
              $region153: #{tpu_custom_call.1} parent=127 // pred_region
                _
              $region154: #{tpu_custom_call.1} parent=127 // pred_fallthru
                _
            $region128: #{tpu_custom_call.1} parent=123 // pred_fallthru
              _
            // Predicated region
            $region129: #{tpu_custom_call.1} parent=123 // pred_check
              _
            $region130: #{tpu_custom_call.1} parent=123 // pred_check_branch
              %1395 = sbr.rel target = $region132
            $region131: #{tpu_custom_call.1} parent=123 // pred_region
              loop: start=0, step=1, limit=1
              $region133: #{tpu_custom_call.1} parent=131 // loop_pre_header
                _
              $region134: #{tpu_custom_call.1} parent=131 // loop_header
                %s1398 = sphi 0, %s1402
                %p1399 = scmp.ge.s32.totalorder %s1398, 1
                %s1403 = sphi %s1359, %s1359
                %s1404 = sphi %s1389, %s1389
              $region135: #{tpu_custom_call.1} parent=131 // loop_header_branch
                %1401 = sbr.rel (%p1399) target = $region139
              $region136: #{tpu_custom_call.1} parent=131 // loop_body
                %v1405 = vld [vmem:[%s1403] sm:$0xff]
                %1406 = vst [vmem:[%s1404] sm:$0xff] %v1405
                %v1407 = vld [vmem:[%s1403 + $0x8] sm:$0xff]
                %1408 = vst [vmem:[%s1404 + $0x10] sm:$0xff] %v1407
                %v1409 = vld [vmem:[%s1403 + $0x10] sm:$0xff]
                %1410 = vst [vmem:[%s1404 + $0x20] sm:$0xff] %v1409
                %v1411 = vld [vmem:[%s1403 + $0x18] sm:$0xff]
                %1412 = vst [vmem:[%s1404 + $0x30] sm:$0xff] %v1411
                %v1413 = vld [vmem:[%s1403 + $0x20] sm:$0xff]
                %1414 = vst [vmem:[%s1404 + $0x40] sm:$0xff] %v1413
                %v1415 = vld [vmem:[%s1403 + $0x28] sm:$0xff]
                %1416 = vst [vmem:[%s1404 + $0x50] sm:$0xff] %v1415
                %v1417 = vld [vmem:[%s1403 + $0x30] sm:$0xff]
                %1418 = vst [vmem:[%s1404 + $0x60] sm:$0xff] %v1417
                %v1419 = vld [vmem:[%s1403 + $0x38] sm:$0xff]
                %1420 = vst [vmem:[%s1404 + $0x70] sm:$0xff] %v1419
              $region137: #{tpu_custom_call.1} parent=131 // loop_footer
                %s1402 = sadd.s32 1, %s1398
              $region138: #{tpu_custom_call.1} parent=131 // loop_footer_branch
                %1397 = sbr.rel target = $region134
              $region139: #{tpu_custom_call.1} parent=131 // loop_exit
                _
            $region132: #{tpu_custom_call.1} parent=123 // pred_fallthru
              _
          $region124: #{tpu_custom_call.1} parent=119 // pred_fallthru
            _
          %1449 = vnop
        $region120: #{tpu_custom_call.1} parent=99 // pred_fallthru
          _
        // Predicated region
        $region155: #{tpu_custom_call.1} parent=99 // pred_check
          %p1450 = pneg %p185
        $region156: #{tpu_custom_call.1} parent=99 // pred_check_branch
          %1452 = sbr.rel (%p1450) target = $region158
        $region157: #{tpu_custom_call.1} parent=99 // pred_region
          %s1453 = smul.u32 8, %s25
          %s1454 = smul.addr %s1453, 2
          %s1455 = sadd.s32 %s24, %s1454
          %s1456 = smul.addr %s1455, 8
          %s1457 = scalar_lea.vmem %s5, %s1456
          // Predicated region
          $region159: #{tpu_custom_call.1} parent=157 // pred_check
            _
          $region160: #{tpu_custom_call.1} parent=157 // pred_check_branch
            %1459 = sbr.rel (0) target = $region162
          $region161: #{tpu_custom_call.1} parent=157 // pred_region
            // Predicated region
            $region163: #{tpu_custom_call.1} parent=161 // pred_check
              _
            $region164: #{tpu_custom_call.1} parent=161 // pred_check_branch
              %1461 = sbr.rel (0) target = $region166
            $region165: #{tpu_custom_call.1} parent=161 // pred_region
              // Predicated region
              $region178: #{tpu_custom_call.1} parent=165 // pred_check
                _
              $region179: #{tpu_custom_call.1} parent=165 // pred_check_branch
                %1490 = sbr.rel (0) target = $region181
              $region180: #{tpu_custom_call.1} parent=165 // pred_region
                loop: start=0, step=1, limit=1
                $region182: #{tpu_custom_call.1} parent=180 // loop_pre_header
                  _
                $region183: #{tpu_custom_call.1} parent=180 // loop_header
                  %s1492 = sphi 0, %s1496
                  %p1493 = scmp.ge.s32.totalorder %s1492, 1
                  %s1497 = sphi %s1363, %s1363
                  %s1498 = sphi %s1457, %s1457
                $region184: #{tpu_custom_call.1} parent=180 // loop_header_branch
                  %1495 = sbr.rel (%p1493) target = $region188
                $region185: #{tpu_custom_call.1} parent=180 // loop_body
                  %v1499 = vld [vmem:[%s1497] sm:$0xff]
                  %1500 = vst [vmem:[%s1498] sm:$0xff] %v1499
                  %v1501 = vld [vmem:[%s1497 + $0x8] sm:$0xff]
                  %1502 = vst [vmem:[%s1498 + $0x10] sm:$0xff] %v1501
                  %v1503 = vld [vmem:[%s1497 + $0x10] sm:$0xff]
                  %1504 = vst [vmem:[%s1498 + $0x20] sm:$0xff] %v1503
                  %v1505 = vld [vmem:[%s1497 + $0x18] sm:$0xff]
                  %1506 = vst [vmem:[%s1498 + $0x30] sm:$0xff] %v1505
                  %v1507 = vld [vmem:[%s1497 + $0x20] sm:$0xff]
                  %1508 = vst [vmem:[%s1498 + $0x40] sm:$0xff] %v1507
                  %v1509 = vld [vmem:[%s1497 + $0x28] sm:$0xff]
                  %1510 = vst [vmem:[%s1498 + $0x50] sm:$0xff] %v1509
                  %v1511 = vld [vmem:[%s1497 + $0x30] sm:$0xff]
                  %1512 = vst [vmem:[%s1498 + $0x60] sm:$0xff] %v1511
                  %v1513 = vld [vmem:[%s1497 + $0x38] sm:$0xff]
                  %1514 = vst [vmem:[%s1498 + $0x70] sm:$0xff] %v1513
                $region186: #{tpu_custom_call.1} parent=180 // loop_footer
                  %s1496 = sadd.s32 1, %s1492
                $region187: #{tpu_custom_call.1} parent=180 // loop_footer_branch
                  %1491 = sbr.rel target = $region183
                $region188: #{tpu_custom_call.1} parent=180 // loop_exit
                  _
              $region181: #{tpu_custom_call.1} parent=165 // pred_fallthru
                _
              // Predicated region
              $region189: #{tpu_custom_call.1} parent=165 // pred_check
                _
              $region190: #{tpu_custom_call.1} parent=165 // pred_check_branch
                %1516 = sbr.rel target = $region192
              $region191: #{tpu_custom_call.1} parent=165 // pred_region
                _
              $region192: #{tpu_custom_call.1} parent=165 // pred_fallthru
                _
            $region166: #{tpu_custom_call.1} parent=161 // pred_fallthru
              _
            // Predicated region
            $region167: #{tpu_custom_call.1} parent=161 // pred_check
              _
            $region168: #{tpu_custom_call.1} parent=161 // pred_check_branch
              %1463 = sbr.rel target = $region170
            $region169: #{tpu_custom_call.1} parent=161 // pred_region
              loop: start=0, step=1, limit=1
              $region171: #{tpu_custom_call.1} parent=169 // loop_pre_header
                _
              $region172: #{tpu_custom_call.1} parent=169 // loop_header
                %s1466 = sphi 0, %s1470
                %p1467 = scmp.ge.s32.totalorder %s1466, 1
                %s1471 = sphi %s1363, %s1363
                %s1472 = sphi %s1457, %s1457
              $region173: #{tpu_custom_call.1} parent=169 // loop_header_branch
                %1469 = sbr.rel (%p1467) target = $region177
              $region174: #{tpu_custom_call.1} parent=169 // loop_body
                %v1473 = vld [vmem:[%s1471] sm:$0xff]
                %1474 = vst [vmem:[%s1472] sm:$0xff] %v1473
                %v1475 = vld [vmem:[%s1471 + $0x8] sm:$0xff]
                %1476 = vst [vmem:[%s1472 + $0x10] sm:$0xff] %v1475
                %v1477 = vld [vmem:[%s1471 + $0x10] sm:$0xff]
                %1478 = vst [vmem:[%s1472 + $0x20] sm:$0xff] %v1477
                %v1479 = vld [vmem:[%s1471 + $0x18] sm:$0xff]
                %1480 = vst [vmem:[%s1472 + $0x30] sm:$0xff] %v1479
                %v1481 = vld [vmem:[%s1471 + $0x20] sm:$0xff]
                %1482 = vst [vmem:[%s1472 + $0x40] sm:$0xff] %v1481
                %v1483 = vld [vmem:[%s1471 + $0x28] sm:$0xff]
                %1484 = vst [vmem:[%s1472 + $0x50] sm:$0xff] %v1483
                %v1485 = vld [vmem:[%s1471 + $0x30] sm:$0xff]
                %1486 = vst [vmem:[%s1472 + $0x60] sm:$0xff] %v1485
                %v1487 = vld [vmem:[%s1471 + $0x38] sm:$0xff]
                %1488 = vst [vmem:[%s1472 + $0x70] sm:$0xff] %v1487
              $region175: #{tpu_custom_call.1} parent=169 // loop_footer
                %s1470 = sadd.s32 1, %s1466
              $region176: #{tpu_custom_call.1} parent=169 // loop_footer_branch
                %1465 = sbr.rel target = $region172
              $region177: #{tpu_custom_call.1} parent=169 // loop_exit
                _
            $region170: #{tpu_custom_call.1} parent=161 // pred_fallthru
              _
          $region162: #{tpu_custom_call.1} parent=157 // pred_fallthru
            _
          %1517 = vnop
        $region158: #{tpu_custom_call.1} parent=99 // pred_fallthru
          _
      $region100: #{tpu_custom_call.1} parent=5 // pred_fallthru
        _
      %p1518 = scmp.le.s32.totalorder 2, %s15
      // Predicated region
      $region193: #{tpu_custom_call.1} parent=5 // pred_check
        %p1519 = pneg %p1518
      $region194: #{tpu_custom_call.1} parent=5 // pred_check_branch
        %1521 = sbr.rel (%p1519) target = $region196
      $region195: #{tpu_custom_call.1} parent=5 // pred_region
        %s1522 = ssub.s32 %s15, 2
        // Predicated region
        $region197: #{tpu_custom_call.1} parent=195 // pred_check
          %p1523 = pneg %p135
        $region198: #{tpu_custom_call.1} parent=195 // pred_check_branch
          %1525 = sbr.rel (%p1523) target = $region200
        $region199: #{tpu_custom_call.1} parent=195 // pred_region
          %s1526 = sand.u32 %s120, 1
          %s1527 = scalar_lea.sflag [#allocation9], %s1526
          %s1528 = sand.u32 %s120, 1
          %s1529 = smul.addr %s1528, 64
          %s1530 = scalar_lea.vmem [#allocation8], %s1529
          %1531 = dma.done %s1527, 1024
        $region200: #{tpu_custom_call.1} parent=195 // pred_fallthru
          _
        // Predicated region
        $region201: #{tpu_custom_call.1} parent=195 // pred_check
          %p1532 = pneg %p163
        $region202: #{tpu_custom_call.1} parent=195 // pred_check_branch
          %1534 = sbr.rel (%p1532) target = $region204
        $region203: #{tpu_custom_call.1} parent=195 // pred_region
          %s1535 = sand.u32 %s148, 1
          %s1536 = sand.u32 %s148, 1
          %s1537 = smul.addr %s1536, 64
          %s1538 = scalar_lea.vmem [#allocation10], %s1537
        $region204: #{tpu_custom_call.1} parent=195 // pred_fallthru
          _
        // Predicated region
        $region205: #{tpu_custom_call.1} parent=195 // pred_check
          %p1539 = pneg %p191
        $region206: #{tpu_custom_call.1} parent=195 // pred_check_branch
          %1541 = sbr.rel (%p1539) target = $region208
        $region207: #{tpu_custom_call.1} parent=195 // pred_region
          %s1542 = sand.u32 %s176, 1
          %s1543 = sand.u32 %s176, 1
          %s1544 = smul.addr %s1543, 64
          %s1545 = scalar_lea.vmem [#allocation11], %s1544
        $region208: #{tpu_custom_call.1} parent=195 // pred_fallthru
          _
      $region196: #{tpu_custom_call.1} parent=5 // pred_fallthru
        _
    $region6: #{tpu_custom_call.1} parent=1 // loop_footer
      %s19 = sadd.s32 1, %s15
    $region7: #{tpu_custom_call.1} parent=1 // loop_footer_branch
      %14 = sbr.rel target = $region3
    $region8: #{tpu_custom_call.1} parent=1 // loop_exit
      _
    %1546 = vsyncpa [#allocation9], 1
    %s1547 = scalar_lea.sflag [#allocation9], 1
    %1548 = vsyncpa %s1547, 1

</llo_original>
